<compile_context>
chip_gen: v5e
topology: v5e:2x2
jax: 0.10.0
libtpu: 0.0.40
codegen_flags: <defaults>
</compile_context>

<pallas_src>
import math

import jax
import jax.numpy as jnp
from jax.experimental import pallas as pl
from jax.experimental.pallas import tpu as pltpu  # noqa: F401  (TPU backend)

# ---------------- config (small synthetic shapes) ----------------
N_NODES = 16          # multiple of 8 (sublane)
N_EDGES = 40          # multiple of 8
N_INPUT_FEATS = 8
CHANNELS = 32
LATENT = 16
EDGE_FEAT_DIM = 7
PAD = 128             # TPU lane width: all feature dims zero-padded to 128
LN_EPS = 1e-5         # PyTorch nn.LayerNorm default

PARAM_ORDER = (
    "emb_w1", "emb_b1", "emb_g1", "emb_be1",
    "emb_w2", "emb_b2", "emb_g2", "emb_be2",
    "edge_ws", "edge_wd", "edge_wr", "edge_we", "edge_b1",
    "edge_w2", "edge_b2",
    "node_w1a", "node_w1b", "node_b1", "node_w2", "node_b2",
    "head_w", "head_b",
    "dec_w0", "dec_b0", "dec_w1", "dec_b1",
)


# ---------------- in-kernel math helpers ----------------
def _mm(a, b):
    return jnp.dot(a, b, preferred_element_type=jnp.float32)


def _layernorm(x, gamma, beta):
    # LayerNorm over the real CHANNELS features. Padded lanes of x are exactly
    # zero, so lane sums / CHANNELS give the exact mean and E[x^2]; gamma/beta
    # are zero in padded lanes so the result stays zero-padded.
    inv_n = 1.0 / CHANNELS
    mean = jnp.sum(x, axis=-1, keepdims=True) * inv_n
    var = jnp.sum(x * x, axis=-1, keepdims=True) * inv_n - mean * mean
    return (x - mean) * jax.lax.rsqrt(var + LN_EPS) * gamma + beta


def _gelu(x):
    # TODO(synk): PyTorch nn.GELU() default is erf-exact; tanh approximation is
    # used because erf lowering is not guaranteed in Pallas/Mosaic (~1e-3 dev).
    c = 0.7978845608028654  # sqrt(2/pi)
    return 0.5 * x * (1.0 + jnp.tanh(c * (x + 0.044715 * x * x * x)))


def _silu(x):
    return x * (1.0 / (1.0 + jnp.exp(-x)))


# ---------------- the single fused Pallas kernel ----------------
def maskgae_fused_kernel(
    # ---- data ----
    x_ref, ea_ref, xyz_ref, eps_ref,
    sd_ref, dstrow_ref, decidx_ref,
    # ---- Encoder.initial_node_embedding ----
    w1_ref, b1_ref, g1_ref, be1_ref, w2_ref, b2_ref, g2_ref, be2_ref,
    # ---- EGNNConv edge MLP (first Linear split by input block) ----
    wes_ref, wed_ref, wrad_ref, wee_ref, eb1_ref, ew2_ref, eb2_ref,
    # ---- EGNNConv node MLP (first Linear split across [h, h_neigh]) ----
    wn1a_ref, wn1b_ref, nb1_ref, wn2_ref, nb2_ref,
    # ---- fused mu|logvar head ----
    whd_ref, bhd_ref,
    # ---- EdgeDecoder ----
    dw0_ref, db0_ref, dw1_ref, db1_ref,
    # ---- outputs ----
    z_ref, mu_ref, lv_ref, dec_ref,
):
    # Encoder.initial_node_embedding: (Linear+LayerNorm+GELU) x2, dropout=id
    h = _mm(x_ref[...], w1_ref[...]) + b1_ref[...]
    h = _gelu(_layernorm(h, g1_ref[...], be1_ref[...]))
    h = _mm(h, w2_ref[...]) + b2_ref[...]
    h = _gelu(_layernorm(h, g2_ref[...], be2_ref[...]))            # (N, PAD)

    # Batched in-kernel gathers: one stacked one-hot [src ; dst] -> one matmul
    # each for h and xyz; halves split with sublane-aligned row slices.
    sd = sd_ref[...]                                               # (2E, 1)
    sd_iota = jax.lax.broadcasted_iota(jnp.int32, (2 * N_EDGES, N_NODES), 1)
    oh_sd = (sd_iota == sd).astype(jnp.float32)                    # (2E, N)
    h_sd = _mm(oh_sd, h)                                           # (2E, PAD)
    xyz_sd = _mm(oh_sd, xyz_ref[...])                              # (2E, PAD)
    h_src, h_dst = h_sd[:N_EDGES], h_sd[N_EDGES:]
    x_diff = xyz_sd[:N_EDGES] - xyz_sd[N_EDGES:]
    radial = jnp.sum(x_diff * x_diff, axis=-1, keepdims=True)      # (E, 1)

    # EGNNConv edge MLP on [h_src, h_dst, radial, edge_attr]:
    # Linear -> SiLU -> Linear -> SiLU (concat realized as split-weight matmuls)
    msg = (_mm(h_src, wes_ref[...]) + _mm(h_dst, wed_ref[...])
           + radial * wrad_ref[...] + _mm(ea_ref[...], wee_ref[...])
           + eb1_ref[...])
    msg = _silu(msg)
    msg = _silu(_mm(msg, ew2_ref[...]) + eb2_ref[...])             # (E, PAD)

    # sum-aggregation at destination nodes: (N, E) one-hot built in-kernel
    n_iota = jax.lax.broadcasted_iota(jnp.int32, (N_NODES, N_EDGES), 0)
    scatter = (n_iota == dstrow_ref[...]).astype(jnp.float32)      # (N, E)
    h_neigh = _mm(scatter, msg)                                    # (N, PAD)

    # EGNNConv node MLP on concat([h, h_neigh])
    pre = _mm(h, wn1a_ref[...]) + _mm(h_neigh, wn1b_ref[...]) + nb1_ref[...]
    hn = _mm(_silu(pre), wn2_ref[...]) + nb2_ref[...]              # (N, PAD)
    # TODO(synk): EGNNConv coord_mlp / msg_x path omitted — GraphConv discards
    # the coordinate output, so it cannot affect the returned tensors.

    # Fused mu|logvar head (split at the 128-lane boundary: vreg-aligned)
    hd = _mm(hn, whd_ref[...]) + bhd_ref[...]                      # (N, 2*PAD)
    mu = hd[:, :PAD]
    lv = hd[:, PAD:]
    # reparametrize: std = exp(logvar), eps ~ U[0,1). Padded lanes of mu/lv/eps
    # are all exactly zero, so z stays zero-padded too.
    z = eps_ref[...] * jnp.exp(lv) + mu
    z_ref[...] = z
    mu_ref[...] = mu
    lv_ref[...] = lv

    # EdgeDecoder (sigmoid=False, dropout=identity) on stacked [masked ; neg]:
    # all 4E endpoint gathers from z done in one (4E,N) x (N,PAD) matmul.
    d_iota = jax.lax.broadcasted_iota(jnp.int32, (4 * N_EDGES, N_NODES), 1)
    oh_d = (d_iota == decidx_ref[...]).astype(jnp.float32)         # (4E, N)
    gz = _mm(oh_d, z)                                              # (4E, PAD)
    xe = gz[:2 * N_EDGES] * gz[2 * N_EDGES:]                       # (2E, PAD)
    xe = jnp.maximum(_mm(xe, dw0_ref[...]) + db0_ref[...], 0.0)
    dec_ref[...] = _mm(xe, dw1_ref[...]) + db1_ref[...]


# ---------------- padding helpers (run once, outside the kernel) ----------------
def _pad_block(a, rows=PAD, cols=PAD):
    a = a.astype(jnp.float32)
    return jnp.pad(a, ((0, rows - a.shape[0]), (0, cols - a.shape[1])))


def _pad_cols(a, width=PAD):
    a = a.astype(jnp.float32)
    return jnp.pad(a, ((0, 0), (0, width - a.shape[1])))


# ---------------- parameter init (deterministic, PyTorch-like) ----------------
def init_params(key):
    keys = jax.random.split(key, 10)

    def linear(k, fan_in, fan_out):
        k1, k2 = jax.random.split(k)
        bound = 1.0 / math.sqrt(fan_in)
        w = jax.random.uniform(k1, (fan_in, fan_out), jnp.float32, -bound, bound)
        b = jax.random.uniform(k2, (1, fan_out), jnp.float32, -bound, bound)
        return w, b

    p = {}
    # Encoder.initial_node_embedding
    w, b = linear(keys[0], N_INPUT_FEATS, CHANNELS)
    p["emb_w1"], p["emb_b1"] = _pad_block(w), _pad_block(b, rows=1)
    p["emb_g1"] = _pad_block(jnp.ones((1, CHANNELS), jnp.float32), rows=1)
    p["emb_be1"] = jnp.zeros((1, PAD), jnp.float32)
    w, b = linear(keys[1], CHANNELS, CHANNELS)
    p["emb_w2"], p["emb_b2"] = _pad_block(w), _pad_block(b, rows=1)
    p["emb_g2"] = _pad_block(jnp.ones((1, CHANNELS), jnp.float32), rows=1)
    p["emb_be2"] = jnp.zeros((1, PAD), jnp.float32)

    # EGNNConv edge MLP, first Linear (in = 2C + 1 + edge_feat), split by block
    w, b = linear(keys[2], 2 * CHANNELS + 1 + EDGE_FEAT_DIM, CHANNELS)
    p["edge_ws"] = _pad_block(w[:CHANNELS])                     # rows for h_src
    p["edge_wd"] = _pad_block(w[CHANNELS:2 * CHANNELS])         # rows for h_dst
    p["edge_wr"] = _pad_block(w[2 * CHANNELS:2 * CHANNELS + 1], rows=1)  # radial
    p["edge_we"] = _pad_block(w[2 * CHANNELS + 1:])             # edge_attr rows
    p["edge_b1"] = _pad_block(b, rows=1)
    w, b = linear(keys[3], CHANNELS, CHANNELS)
    p["edge_w2"], p["edge_b2"] = _pad_block(w), _pad_block(b, rows=1)

    # EGNNConv node MLP (first Linear weight split across [h, h_neigh])
    w, b = linear(keys[4], 2 * CHANNELS, CHANNELS)
    p["node_w1a"] = _pad_block(w[:CHANNELS])
    p["node_w1b"] = _pad_block(w[CHANNELS:])
    p["node_b1"] = _pad_block(b, rows=1)
    w, b = linear(keys[5], CHANNELS, CHANNELS)
    p["node_w2"], p["node_b2"] = _pad_block(w), _pad_block(b, rows=1)

    # mu / logvar heads fused into one (PAD, 2*PAD) weight: lanes [0,128) = mu,
    # lanes [128,256) = logvar.
    w_mu, b_mu = linear(keys[6], CHANNELS, LATENT)
    w_lv, b_lv = linear(keys[7], CHANNELS, LATENT)
    p["head_w"] = jnp.concatenate([_pad_block(w_mu), _pad_block(w_lv)], axis=1)
    p["head_b"] = jnp.concatenate(
        [_pad_block(b_mu, rows=1), _pad_block(b_lv, rows=1)], axis=1)

    # EdgeDecoder (in=latent, hidden=channels, out=n_input_feats, 2 layers)
    w, b = linear(keys[8], LATENT, CHANNELS)
    p["dec_w0"], p["dec_b0"] = _pad_block(w), _pad_block(b, rows=1)
    w, b = linear(keys[9], CHANNELS, N_INPUT_FEATS)
    p["dec_w1"], p["dec_b1"] = _pad_block(w), _pad_block(b, rows=1)
    return p


# ---------------- MaskGAE forward (jittable, single pallas_call) ----------------
@jax.jit
def maskgae_forward(params, node_attr, edge_index, edge_attr, xyz, key):
    k_mask, k_neg, k_eps = jax.random.split(key, 3)
    src = edge_index[0].astype(jnp.int32)                     # (E,)
    dst = edge_index[1].astype(jnp.int32)

    # mask_edge(p=0.7): static-shape stable compaction, masked edges first.
    mask = jax.random.bernoulli(k_mask, 0.7, (N_EDGES,))      # True => masked
    perm = jnp.argsort(1 - mask.astype(jnp.int32), stable=True)
    num_masked = jnp.sum(mask.astype(jnp.int32))
    pos_e0 = src[perm]                                        # first num_masked
    pos_e1 = dst[perm]                                        # rows are valid

    # random_negative_sampler (randint over nodes); first num_masked rows used.
    neg = jax.random.randint(k_neg, (2, N_EDGES), 0, N_NODES, dtype=jnp.int32)

    # Stacked index tensors for the batched in-kernel one-hot gathers.
    sd_idx = jnp.concatenate([src, dst])[:, None]             # (2E, 1)
    dec_idx = jnp.concatenate(
        [pos_e0, neg[0], pos_e1, neg[1]])[:, None]            # (4E, 1)
    dst_row = dst[None, :]                                    # (1, E)

    # eps ~ U[0,1), matching torch.rand_like
    eps = jax.random.uniform(k_eps, (N_NODES, LATENT), jnp.float32)

    inputs = [
        _pad_cols(node_attr), _pad_cols(edge_attr), _pad_cols(xyz),
        _pad_cols(eps),
        sd_idx, dst_row, dec_idx,
    ] + [params[k] for k in PARAM_ORDER]

    out_shape = [
        jax.ShapeDtypeStruct((N_NODES, PAD), jnp.float32),      # z
        jax.ShapeDtypeStruct((N_NODES, PAD), jnp.float32),      # mu
        jax.ShapeDtypeStruct((N_NODES, PAD), jnp.float32),      # logvar
        jax.ShapeDtypeStruct((2 * N_EDGES, PAD), jnp.float32),  # [pos ; neg]
    ]
    # Grid-less call: every array is a single full VMEM block (lane-padded to
    # 128), so all stores are lane-dense and there is exactly one dispatch.
    z_pad, mu_pad, lv_pad, dec_pad = pl.pallas_call(
        maskgae_fused_kernel, out_shape=out_shape)(*inputs)

    z = z_pad[:, :LATENT]
    mu = mu_pad[:, :LATENT]
    logvar = lv_pad[:, :LATENT]
    # Fixed-size decoder outputs; only the first num_masked rows correspond to
    # the PyTorch pos_out / neg_out (static shapes keep the forward jittable).
    pos_out = dec_pad[:N_EDGES, :N_INPUT_FEATS]
    neg_out = dec_pad[N_EDGES:, :N_INPUT_FEATS]
    return z, mu, logvar, pos_out, neg_out, num_masked


if __name__ == "__main__":
    root = jax.random.PRNGKey(0)
    kp, kd, kf = jax.random.split(root, 3)
    params = init_params(kp)

    ka, ke, kx, kei = jax.random.split(kd, 4)
    node_attr = jax.random.normal(ka, (N_NODES, N_INPUT_FEATS), jnp.float32)
    edge_attr = jax.random.normal(ke, (N_EDGES, EDGE_FEAT_DIM), jnp.float32)
    xyz = jax.random.normal(kx, (N_NODES, 3), jnp.float32)
    edge_index = jax.random.randint(kei, (2, N_EDGES), 0, N_NODES,
                                    dtype=jnp.int32)

    outs = maskgae_forward(params, node_attr, edge_index, edge_attr, xyz, kf)
    jax.block_until_ready(outs)
    z, mu, logvar, pos_out, neg_out, num_masked = outs

    assert z.shape == (N_NODES, LATENT)
    assert mu.shape == (N_NODES, LATENT) and logvar.shape == (N_NODES, LATENT)
    assert pos_out.shape == (N_EDGES, N_INPUT_FEATS)
    assert neg_out.shape == (N_EDGES, N_INPUT_FEATS)
    nm = int(num_masked)
    assert 0 <= nm <= N_EDGES
    pos_valid = pos_out[:nm]   # rows matching the PyTorch masked-edge output
    neg_valid = neg_out[:nm]
    assert bool(jnp.all(jnp.isfinite(z)))
    assert bool(jnp.all(jnp.isfinite(mu))) and bool(jnp.all(jnp.isfinite(logvar)))
    assert bool(jnp.all(jnp.isfinite(pos_valid))) and bool(
        jnp.all(jnp.isfinite(neg_valid)))
    print("KERNEL_OK")
</pallas_src>

<mosaic_0001>
module attributes {stable_mosaic.version = 11 : i64} {
  func.func @maskgae_fused_kernel(%arg0: memref<16x128xf32, #tpu.memory_space<vmem>>, %arg1: memref<40x128xf32, #tpu.memory_space<vmem>>, %arg2: memref<16x128xf32, #tpu.memory_space<vmem>>, %arg3: memref<16x128xf32, #tpu.memory_space<vmem>>, %arg4: memref<80x1xi32, #tpu.memory_space<vmem>>, %arg5: memref<1x40xi32, #tpu.memory_space<vmem>>, %arg6: memref<160x1xi32, #tpu.memory_space<vmem>>, %arg7: memref<128x128xf32, #tpu.memory_space<vmem>>, %arg8: memref<1x128xf32, #tpu.memory_space<vmem>>, %arg9: memref<1x128xf32, #tpu.memory_space<vmem>>, %arg10: memref<1x128xf32, #tpu.memory_space<vmem>>, %arg11: memref<128x128xf32, #tpu.memory_space<vmem>>, %arg12: memref<1x128xf32, #tpu.memory_space<vmem>>, %arg13: memref<1x128xf32, #tpu.memory_space<vmem>>, %arg14: memref<1x128xf32, #tpu.memory_space<vmem>>, %arg15: memref<128x128xf32, #tpu.memory_space<vmem>>, %arg16: memref<128x128xf32, #tpu.memory_space<vmem>>, %arg17: memref<1x128xf32, #tpu.memory_space<vmem>>, %arg18: memref<128x128xf32, #tpu.memory_space<vmem>>, %arg19: memref<1x128xf32, #tpu.memory_space<vmem>>, %arg20: memref<128x128xf32, #tpu.memory_space<vmem>>, %arg21: memref<1x128xf32, #tpu.memory_space<vmem>>, %arg22: memref<128x128xf32, #tpu.memory_space<vmem>>, %arg23: memref<128x128xf32, #tpu.memory_space<vmem>>, %arg24: memref<1x128xf32, #tpu.memory_space<vmem>>, %arg25: memref<128x128xf32, #tpu.memory_space<vmem>>, %arg26: memref<1x128xf32, #tpu.memory_space<vmem>>, %arg27: memref<128x256xf32, #tpu.memory_space<vmem>>, %arg28: memref<1x256xf32, #tpu.memory_space<vmem>>, %arg29: memref<128x128xf32, #tpu.memory_space<vmem>>, %arg30: memref<1x128xf32, #tpu.memory_space<vmem>>, %arg31: memref<128x128xf32, #tpu.memory_space<vmem>>, %arg32: memref<1x128xf32, #tpu.memory_space<vmem>>, %arg33: memref<16x128xf32, #tpu.memory_space<vmem>>, %arg34: memref<16x128xf32, #tpu.memory_space<vmem>>, %arg35: memref<16x128xf32, #tpu.memory_space<vmem>>, %arg36: memref<80x128xf32, #tpu.memory_space<vmem>>) attributes {dimension_semantics = [], scalar_prefetch = 0 : i64, scratch_operands = 0 : i64, tpu.core_type = #tpu.core_type<tc>} {
    %c0 = arith.constant 0 : index
    %c0_0 = arith.constant 0 : index
    %0 = vector.load %arg0[%c0, %c0_0] : memref<16x128xf32, #tpu.memory_space<vmem>>, vector<16x128xf32>
    %c0_1 = arith.constant 0 : index
    %c0_2 = arith.constant 0 : index
    %1 = vector.load %arg7[%c0_1, %c0_2] : memref<128x128xf32, #tpu.memory_space<vmem>>, vector<128x128xf32>
    %cst = arith.constant dense<0.000000e+00> : vector<16x128xf32>
    %2 = tpu.matmul %0, %1, %cst {dimension_numbers = #tpu.dot_dimension_numbers<[1], [0], [0], [1], [0, 0, 1, 1], [], []>} : vector<16x128xf32>, vector<128x128xf32>, vector<16x128xf32> -> vector<16x128xf32>
    %c0_3 = arith.constant 0 : index
    %c0_4 = arith.constant 0 : index
    %3 = vector.load %arg8[%c0_3, %c0_4] : memref<1x128xf32, #tpu.memory_space<vmem>>, vector<1x128xf32>
    %4 = vector.broadcast %3 : vector<1x128xf32> to vector<16x128xf32>
    %5 = arith.addf %2, %4 : vector<16x128xf32>
    %c0_5 = arith.constant 0 : index
    %c0_6 = arith.constant 0 : index
    %6 = vector.load %arg9[%c0_5, %c0_6] : memref<1x128xf32, #tpu.memory_space<vmem>>, vector<1x128xf32>
    %c0_7 = arith.constant 0 : index
    %c0_8 = arith.constant 0 : index
    %7 = vector.load %arg10[%c0_7, %c0_8] : memref<1x128xf32, #tpu.memory_space<vmem>>, vector<1x128xf32>
    %cst_9 = arith.constant dense<0.000000e+00> : vector<16xf32>
    %8 = vector.multi_reduction <add>, %5, %cst_9 [1] : vector<16x128xf32> to vector<16xf32>
    %9 = vector.shape_cast %8 : vector<16xf32> to vector<16x1xf32>
    %cst_10 = arith.constant 3.125000e-02 : f32
    %10 = vector.broadcast %cst_10 : f32 to vector<16x1xf32>
    %11 = arith.mulf %9, %10 : vector<16x1xf32>
    %12 = arith.mulf %5, %5 : vector<16x128xf32>
    %cst_11 = arith.constant dense<0.000000e+00> : vector<16xf32>
    %13 = vector.multi_reduction <add>, %12, %cst_11 [1] : vector<16x128xf32> to vector<16xf32>
    %14 = vector.shape_cast %13 : vector<16xf32> to vector<16x1xf32>
    %cst_12 = arith.constant 3.125000e-02 : f32
    %15 = vector.broadcast %cst_12 : f32 to vector<16x1xf32>
    %16 = arith.mulf %14, %15 : vector<16x1xf32>
    %17 = arith.mulf %11, %11 : vector<16x1xf32>
    %18 = arith.subf %16, %17 : vector<16x1xf32>
    %19 = vector.broadcast %11 : vector<16x1xf32> to vector<16x128xf32>
    %20 = arith.subf %5, %19 : vector<16x128xf32>
    %cst_13 = arith.constant 9.99999974E-6 : f32
    %21 = vector.broadcast %cst_13 : f32 to vector<16x1xf32>
    %22 = arith.addf %18, %21 : vector<16x1xf32>
    %23 = math.rsqrt %22 : vector<16x1xf32>
    %24 = vector.broadcast %23 : vector<16x1xf32> to vector<16x128xf32>
    %25 = arith.mulf %20, %24 : vector<16x128xf32>
    %26 = vector.broadcast %6 : vector<1x128xf32> to vector<16x128xf32>
    %27 = arith.mulf %25, %26 : vector<16x128xf32>
    %28 = vector.broadcast %7 : vector<1x128xf32> to vector<16x128xf32>
    %29 = arith.addf %27, %28 : vector<16x128xf32>
    %cst_14 = arith.constant 5.000000e-01 : f32
    %30 = vector.broadcast %cst_14 : f32 to vector<16x128xf32>
    %31 = arith.mulf %30, %29 : vector<16x128xf32>
    %cst_15 = arith.constant 4.471500e-02 : f32
    %32 = vector.broadcast %cst_15 : f32 to vector<16x128xf32>
    %33 = arith.mulf %32, %29 : vector<16x128xf32>
    %34 = arith.mulf %33, %29 : vector<16x128xf32>
    %35 = arith.mulf %34, %29 : vector<16x128xf32>
    %36 = arith.addf %29, %35 : vector<16x128xf32>
    %cst_16 = arith.constant 0.797884583 : f32
    %37 = vector.broadcast %cst_16 : f32 to vector<16x128xf32>
    %38 = arith.mulf %37, %36 : vector<16x128xf32>
    %39 = math.tanh %38 : vector<16x128xf32>
    %cst_17 = arith.constant 1.000000e+00 : f32
    %40 = vector.broadcast %cst_17 : f32 to vector<16x128xf32>
    %41 = arith.addf %40, %39 : vector<16x128xf32>
    %42 = arith.mulf %31, %41 : vector<16x128xf32>
    %c0_18 = arith.constant 0 : index
    %c0_19 = arith.constant 0 : index
    %43 = vector.load %arg11[%c0_18, %c0_19] : memref<128x128xf32, #tpu.memory_space<vmem>>, vector<128x128xf32>
    %cst_20 = arith.constant dense<0.000000e+00> : vector<16x128xf32>
    %44 = tpu.matmul %42, %43, %cst_20 {dimension_numbers = #tpu.dot_dimension_numbers<[1], [0], [0], [1], [0, 0, 1, 1], [], []>} : vector<16x128xf32>, vector<128x128xf32>, vector<16x128xf32> -> vector<16x128xf32>
    %c0_21 = arith.constant 0 : index
    %c0_22 = arith.constant 0 : index
    %45 = vector.load %arg12[%c0_21, %c0_22] : memref<1x128xf32, #tpu.memory_space<vmem>>, vector<1x128xf32>
    %46 = vector.broadcast %45 : vector<1x128xf32> to vector<16x128xf32>
    %47 = arith.addf %44, %46 : vector<16x128xf32>
    %c0_23 = arith.constant 0 : index
    %c0_24 = arith.constant 0 : index
    %48 = vector.load %arg13[%c0_23, %c0_24] : memref<1x128xf32, #tpu.memory_space<vmem>>, vector<1x128xf32>
    %c0_25 = arith.constant 0 : index
    %c0_26 = arith.constant 0 : index
    %49 = vector.load %arg14[%c0_25, %c0_26] : memref<1x128xf32, #tpu.memory_space<vmem>>, vector<1x128xf32>
    %cst_27 = arith.constant dense<0.000000e+00> : vector<16xf32>
    %50 = vector.multi_reduction <add>, %47, %cst_27 [1] : vector<16x128xf32> to vector<16xf32>
    %51 = vector.shape_cast %50 : vector<16xf32> to vector<16x1xf32>
    %cst_28 = arith.constant 3.125000e-02 : f32
    %52 = vector.broadcast %cst_28 : f32 to vector<16x1xf32>
    %53 = arith.mulf %51, %52 : vector<16x1xf32>
    %54 = arith.mulf %47, %47 : vector<16x128xf32>
    %cst_29 = arith.constant dense<0.000000e+00> : vector<16xf32>
    %55 = vector.multi_reduction <add>, %54, %cst_29 [1] : vector<16x128xf32> to vector<16xf32>
    %56 = vector.shape_cast %55 : vector<16xf32> to vector<16x1xf32>
    %cst_30 = arith.constant 3.125000e-02 : f32
    %57 = vector.broadcast %cst_30 : f32 to vector<16x1xf32>
    %58 = arith.mulf %56, %57 : vector<16x1xf32>
    %59 = arith.mulf %53, %53 : vector<16x1xf32>
    %60 = arith.subf %58, %59 : vector<16x1xf32>
    %61 = vector.broadcast %53 : vector<16x1xf32> to vector<16x128xf32>
    %62 = arith.subf %47, %61 : vector<16x128xf32>
    %cst_31 = arith.constant 9.99999974E-6 : f32
    %63 = vector.broadcast %cst_31 : f32 to vector<16x1xf32>
    %64 = arith.addf %60, %63 : vector<16x1xf32>
    %65 = math.rsqrt %64 : vector<16x1xf32>
    %66 = vector.broadcast %65 : vector<16x1xf32> to vector<16x128xf32>
    %67 = arith.mulf %62, %66 : vector<16x128xf32>
    %68 = vector.broadcast %48 : vector<1x128xf32> to vector<16x128xf32>
    %69 = arith.mulf %67, %68 : vector<16x128xf32>
    %70 = vector.broadcast %49 : vector<1x128xf32> to vector<16x128xf32>
    %71 = arith.addf %69, %70 : vector<16x128xf32>
    %cst_32 = arith.constant 5.000000e-01 : f32
    %72 = vector.broadcast %cst_32 : f32 to vector<16x128xf32>
    %73 = arith.mulf %72, %71 : vector<16x128xf32>
    %cst_33 = arith.constant 4.471500e-02 : f32
    %74 = vector.broadcast %cst_33 : f32 to vector<16x128xf32>
    %75 = arith.mulf %74, %71 : vector<16x128xf32>
    %76 = arith.mulf %75, %71 : vector<16x128xf32>
    %77 = arith.mulf %76, %71 : vector<16x128xf32>
    %78 = arith.addf %71, %77 : vector<16x128xf32>
    %cst_34 = arith.constant 0.797884583 : f32
    %79 = vector.broadcast %cst_34 : f32 to vector<16x128xf32>
    %80 = arith.mulf %79, %78 : vector<16x128xf32>
    %81 = math.tanh %80 : vector<16x128xf32>
    %cst_35 = arith.constant 1.000000e+00 : f32
    %82 = vector.broadcast %cst_35 : f32 to vector<16x128xf32>
    %83 = arith.addf %82, %81 : vector<16x128xf32>
    %84 = arith.mulf %73, %83 : vector<16x128xf32>
    %c0_36 = arith.constant 0 : index
    %c0_37 = arith.constant 0 : index
    %85 = vector.load %arg4[%c0_36, %c0_37] : memref<80x1xi32, #tpu.memory_space<vmem>>, vector<80x1xi32>
    %86 = tpu.iota {dimensions = array<i32: 1>} : vector<80x16xi32>
    %87 = vector.broadcast %85 : vector<80x1xi32> to vector<80x16xi32>
    %88 = arith.cmpi eq, %86, %87 : vector<80x16xi32>
    %89 = arith.extui %88 : vector<80x16xi1> to vector<80x16xi32>
    %90 = arith.sitofp %89 : vector<80x16xi32> to vector<80x16xf32>
    %cst_38 = arith.constant dense<0.000000e+00> : vector<80x128xf32>
    %91 = tpu.matmul %90, %84, %cst_38 {dimension_numbers = #tpu.dot_dimension_numbers<[1], [0], [0], [1], [0, 0, 1, 1], [], []>} : vector<80x16xf32>, vector<16x128xf32>, vector<80x128xf32> -> vector<80x128xf32>
    %c0_39 = arith.constant 0 : index
    %c0_40 = arith.constant 0 : index
    %92 = vector.load %arg2[%c0_39, %c0_40] : memref<16x128xf32, #tpu.memory_space<vmem>>, vector<16x128xf32>
    %cst_41 = arith.constant dense<0.000000e+00> : vector<80x128xf32>
    %93 = tpu.matmul %90, %92, %cst_41 {dimension_numbers = #tpu.dot_dimension_numbers<[1], [0], [0], [1], [0, 0, 1, 1], [], []>} : vector<80x16xf32>, vector<16x128xf32>, vector<80x128xf32> -> vector<80x128xf32>
    %94 = vector.extract_strided_slice %91 {offsets = [0, 0], sizes = [40, 128], strides = [1, 1]} : vector<80x128xf32> to vector<40x128xf32>
    %95 = vector.extract_strided_slice %91 {offsets = [40, 0], sizes = [40, 128], strides = [1, 1]} : vector<80x128xf32> to vector<40x128xf32>
    %96 = vector.extract_strided_slice %93 {offsets = [0, 0], sizes = [40, 128], strides = [1, 1]} : vector<80x128xf32> to vector<40x128xf32>
    %97 = vector.extract_strided_slice %93 {offsets = [40, 0], sizes = [40, 128], strides = [1, 1]} : vector<80x128xf32> to vector<40x128xf32>
    %98 = arith.subf %96, %97 : vector<40x128xf32>
    %99 = arith.mulf %98, %98 : vector<40x128xf32>
    %cst_42 = arith.constant dense<0.000000e+00> : vector<40xf32>
    %100 = vector.multi_reduction <add>, %99, %cst_42 [1] : vector<40x128xf32> to vector<40xf32>
    %101 = vector.shape_cast %100 : vector<40xf32> to vector<40x1xf32>
    %c0_43 = arith.constant 0 : index
    %c0_44 = arith.constant 0 : index
    %102 = vector.load %arg15[%c0_43, %c0_44] : memref<128x128xf32, #tpu.memory_space<vmem>>, vector<128x128xf32>
    %cst_45 = arith.constant dense<0.000000e+00> : vector<40x128xf32>
    %103 = tpu.matmul %94, %102, %cst_45 {dimension_numbers = #tpu.dot_dimension_numbers<[1], [0], [0], [1], [0, 0, 1, 1], [], []>} : vector<40x128xf32>, vector<128x128xf32>, vector<40x128xf32> -> vector<40x128xf32>
    %c0_46 = arith.constant 0 : index
    %c0_47 = arith.constant 0 : index
    %104 = vector.load %arg16[%c0_46, %c0_47] : memref<128x128xf32, #tpu.memory_space<vmem>>, vector<128x128xf32>
    %cst_48 = arith.constant dense<0.000000e+00> : vector<40x128xf32>
    %105 = tpu.matmul %95, %104, %cst_48 {dimension_numbers = #tpu.dot_dimension_numbers<[1], [0], [0], [1], [0, 0, 1, 1], [], []>} : vector<40x128xf32>, vector<128x128xf32>, vector<40x128xf32> -> vector<40x128xf32>
    %106 = arith.addf %103, %105 : vector<40x128xf32>
    %c0_49 = arith.constant 0 : index
    %c0_50 = arith.constant 0 : index
    %107 = vector.load %arg17[%c0_49, %c0_50] : memref<1x128xf32, #tpu.memory_space<vmem>>, vector<1x128xf32>
    %108 = vector.broadcast %101 : vector<40x1xf32> to vector<40x128xf32>
    %109 = vector.broadcast %107 : vector<1x128xf32> to vector<40x128xf32>
    %110 = arith.mulf %108, %109 : vector<40x128xf32>
    %111 = arith.addf %106, %110 : vector<40x128xf32>
    %c0_51 = arith.constant 0 : index
    %c0_52 = arith.constant 0 : index
    %112 = vector.load %arg1[%c0_51, %c0_52] : memref<40x128xf32, #tpu.memory_space<vmem>>, vector<40x128xf32>
    %c0_53 = arith.constant 0 : index
    %c0_54 = arith.constant 0 : index
    %113 = vector.load %arg18[%c0_53, %c0_54] : memref<128x128xf32, #tpu.memory_space<vmem>>, vector<128x128xf32>
    %cst_55 = arith.constant dense<0.000000e+00> : vector<40x128xf32>
    %114 = tpu.matmul %112, %113, %cst_55 {dimension_numbers = #tpu.dot_dimension_numbers<[1], [0], [0], [1], [0, 0, 1, 1], [], []>} : vector<40x128xf32>, vector<128x128xf32>, vector<40x128xf32> -> vector<40x128xf32>
    %115 = arith.addf %111, %114 : vector<40x128xf32>
    %c0_56 = arith.constant 0 : index
    %c0_57 = arith.constant 0 : index
    %116 = vector.load %arg19[%c0_56, %c0_57] : memref<1x128xf32, #tpu.memory_space<vmem>>, vector<1x128xf32>
    %117 = vector.broadcast %116 : vector<1x128xf32> to vector<40x128xf32>
    %118 = arith.addf %115, %117 : vector<40x128xf32>
    %cst_58 = arith.constant 0.000000e+00 : f32
    %119 = vector.broadcast %cst_58 : f32 to vector<40x128xf32>
    %120 = arith.subf %119, %118 : vector<40x128xf32>
    %121 = math.exp %120 : vector<40x128xf32>
    %cst_59 = arith.constant 1.000000e+00 : f32
    %122 = vector.broadcast %cst_59 : f32 to vector<40x128xf32>
    %123 = arith.addf %122, %121 : vector<40x128xf32>
    %cst_60 = arith.constant 1.000000e+00 : f32
    %124 = vector.broadcast %cst_60 : f32 to vector<40x128xf32>
    %125 = arith.divf %124, %123 : vector<40x128xf32>
    %126 = arith.mulf %118, %125 : vector<40x128xf32>
    %c0_61 = arith.constant 0 : index
    %c0_62 = arith.constant 0 : index
    %127 = vector.load %arg20[%c0_61, %c0_62] : memref<128x128xf32, #tpu.memory_space<vmem>>, vector<128x128xf32>
    %cst_63 = arith.constant dense<0.000000e+00> : vector<40x128xf32>
    %128 = tpu.matmul %126, %127, %cst_63 {dimension_numbers = #tpu.dot_dimension_numbers<[1], [0], [0], [1], [0, 0, 1, 1], [], []>} : vector<40x128xf32>, vector<128x128xf32>, vector<40x128xf32> -> vector<40x128xf32>
    %c0_64 = arith.constant 0 : index
    %c0_65 = arith.constant 0 : index
    %129 = vector.load %arg21[%c0_64, %c0_65] : memref<1x128xf32, #tpu.memory_space<vmem>>, vector<1x128xf32>
    %130 = vector.broadcast %129 : vector<1x128xf32> to vector<40x128xf32>
    %131 = arith.addf %128, %130 : vector<40x128xf32>
    %cst_66 = arith.constant 0.000000e+00 : f32
    %132 = vector.broadcast %cst_66 : f32 to vector<40x128xf32>
    %133 = arith.subf %132, %131 : vector<40x128xf32>
    %134 = math.exp %133 : vector<40x128xf32>
    %cst_67 = arith.constant 1.000000e+00 : f32
    %135 = vector.broadcast %cst_67 : f32 to vector<40x128xf32>
    %136 = arith.addf %135, %134 : vector<40x128xf32>
    %cst_68 = arith.constant 1.000000e+00 : f32
    %137 = vector.broadcast %cst_68 : f32 to vector<40x128xf32>
    %138 = arith.divf %137, %136 : vector<40x128xf32>
    %139 = arith.mulf %131, %138 : vector<40x128xf32>
    %140 = tpu.iota {dimensions = array<i32: 0>} : vector<16x40xi32>
    %c0_69 = arith.constant 0 : index
    %c0_70 = arith.constant 0 : index
    %141 = vector.load %arg5[%c0_69, %c0_70] : memref<1x40xi32, #tpu.memory_space<vmem>>, vector<1x40xi32>
    %142 = vector.broadcast %141 : vector<1x40xi32> to vector<16x40xi32>
    %143 = arith.cmpi eq, %140, %142 : vector<16x40xi32>
    %144 = arith.extui %143 : vector<16x40xi1> to vector<16x40xi32>
    %145 = arith.sitofp %144 : vector<16x40xi32> to vector<16x40xf32>
    %cst_71 = arith.constant dense<0.000000e+00> : vector<16x128xf32>
    %146 = tpu.matmul %145, %139, %cst_71 {dimension_numbers = #tpu.dot_dimension_numbers<[1], [0], [0], [1], [0, 0, 1, 1], [], []>} : vector<16x40xf32>, vector<40x128xf32>, vector<16x128xf32> -> vector<16x128xf32>
    %c0_72 = arith.constant 0 : index
    %c0_73 = arith.constant 0 : index
    %147 = vector.load %arg22[%c0_72, %c0_73] : memref<128x128xf32, #tpu.memory_space<vmem>>, vector<128x128xf32>
    %cst_74 = arith.constant dense<0.000000e+00> : vector<16x128xf32>
    %148 = tpu.matmul %84, %147, %cst_74 {dimension_numbers = #tpu.dot_dimension_numbers<[1], [0], [0], [1], [0, 0, 1, 1], [], []>} : vector<16x128xf32>, vector<128x128xf32>, vector<16x128xf32> -> vector<16x128xf32>
    %c0_75 = arith.constant 0 : index
    %c0_76 = arith.constant 0 : index
    %149 = vector.load %arg23[%c0_75, %c0_76] : memref<128x128xf32, #tpu.memory_space<vmem>>, vector<128x128xf32>
    %cst_77 = arith.constant dense<0.000000e+00> : vector<16x128xf32>
    %150 = tpu.matmul %146, %149, %cst_77 {dimension_numbers = #tpu.dot_dimension_numbers<[1], [0], [0], [1], [0, 0, 1, 1], [], []>} : vector<16x128xf32>, vector<128x128xf32>, vector<16x128xf32> -> vector<16x128xf32>
    %151 = arith.addf %148, %150 : vector<16x128xf32>
    %c0_78 = arith.constant 0 : index
    %c0_79 = arith.constant 0 : index
    %152 = vector.load %arg24[%c0_78, %c0_79] : memref<1x128xf32, #tpu.memory_space<vmem>>, vector<1x128xf32>
    %153 = vector.broadcast %152 : vector<1x128xf32> to vector<16x128xf32>
    %154 = arith.addf %151, %153 : vector<16x128xf32>
    %cst_80 = arith.constant 0.000000e+00 : f32
    %155 = vector.broadcast %cst_80 : f32 to vector<16x128xf32>
    %156 = arith.subf %155, %154 : vector<16x128xf32>
    %157 = math.exp %156 : vector<16x128xf32>
    %cst_81 = arith.constant 1.000000e+00 : f32
    %158 = vector.broadcast %cst_81 : f32 to vector<16x128xf32>
    %159 = arith.addf %158, %157 : vector<16x128xf32>
    %cst_82 = arith.constant 1.000000e+00 : f32
    %160 = vector.broadcast %cst_82 : f32 to vector<16x128xf32>
    %161 = arith.divf %160, %159 : vector<16x128xf32>
    %162 = arith.mulf %154, %161 : vector<16x128xf32>
    %c0_83 = arith.constant 0 : index
    %c0_84 = arith.constant 0 : index
    %163 = vector.load %arg25[%c0_83, %c0_84] : memref<128x128xf32, #tpu.memory_space<vmem>>, vector<128x128xf32>
    %cst_85 = arith.constant dense<0.000000e+00> : vector<16x128xf32>
    %164 = tpu.matmul %162, %163, %cst_85 {dimension_numbers = #tpu.dot_dimension_numbers<[1], [0], [0], [1], [0, 0, 1, 1], [], []>} : vector<16x128xf32>, vector<128x128xf32>, vector<16x128xf32> -> vector<16x128xf32>
    %c0_86 = arith.constant 0 : index
    %c0_87 = arith.constant 0 : index
    %165 = vector.load %arg26[%c0_86, %c0_87] : memref<1x128xf32, #tpu.memory_space<vmem>>, vector<1x128xf32>
    %166 = vector.broadcast %165 : vector<1x128xf32> to vector<16x128xf32>
    %167 = arith.addf %164, %166 : vector<16x128xf32>
    %c0_88 = arith.constant 0 : index
    %c0_89 = arith.constant 0 : index
    %168 = vector.load %arg27[%c0_88, %c0_89] : memref<128x256xf32, #tpu.memory_space<vmem>>, vector<128x256xf32>
    %cst_90 = arith.constant dense<0.000000e+00> : vector<16x256xf32>
    %169 = tpu.matmul %167, %168, %cst_90 {dimension_numbers = #tpu.dot_dimension_numbers<[1], [0], [0], [1], [0, 0, 1, 1], [], []>} : vector<16x128xf32>, vector<128x256xf32>, vector<16x256xf32> -> vector<16x256xf32>
    %c0_91 = arith.constant 0 : index
    %c0_92 = arith.constant 0 : index
    %170 = vector.load %arg28[%c0_91, %c0_92] : memref<1x256xf32, #tpu.memory_space<vmem>>, vector<1x256xf32>
    %171 = vector.broadcast %170 : vector<1x256xf32> to vector<16x256xf32>
    %172 = arith.addf %169, %171 : vector<16x256xf32>
    %173 = vector.extract_strided_slice %172 {offsets = [0, 0], sizes = [16, 128], strides = [1, 1]} : vector<16x256xf32> to vector<16x128xf32>
    %174 = vector.extract_strided_slice %172 {offsets = [0, 128], sizes = [16, 128], strides = [1, 1]} : vector<16x256xf32> to vector<16x128xf32>
    %c0_93 = arith.constant 0 : index
    %c0_94 = arith.constant 0 : index
    %175 = vector.load %arg3[%c0_93, %c0_94] : memref<16x128xf32, #tpu.memory_space<vmem>>, vector<16x128xf32>
    %176 = math.exp %174 : vector<16x128xf32>
    %177 = arith.mulf %175, %176 : vector<16x128xf32>
    %178 = arith.addf %177, %173 : vector<16x128xf32>
    %c0_95 = arith.constant 0 : index
    %c0_96 = arith.constant 0 : index
    %179 = vector.load %arg33[%c0_95, %c0_96] : memref<16x128xf32, #tpu.memory_space<vmem>>, vector<16x128xf32>
    tpu.vector_store %arg33[%c0_95, %c0_96], %178 {strides = array<i32>} : memref<16x128xf32, #tpu.memory_space<vmem>>, vector<16x128xf32>,
    %c0_97 = arith.constant 0 : index
    %c0_98 = arith.constant 0 : index
    %180 = vector.load %arg34[%c0_97, %c0_98] : memref<16x128xf32, #tpu.memory_space<vmem>>, vector<16x128xf32>
    tpu.vector_store %arg34[%c0_97, %c0_98], %173 {strides = array<i32>} : memref<16x128xf32, #tpu.memory_space<vmem>>, vector<16x128xf32>,
    %c0_99 = arith.constant 0 : index
    %c0_100 = arith.constant 0 : index
    %181 = vector.load %arg35[%c0_99, %c0_100] : memref<16x128xf32, #tpu.memory_space<vmem>>, vector<16x128xf32>
    tpu.vector_store %arg35[%c0_99, %c0_100], %174 {strides = array<i32>} : memref<16x128xf32, #tpu.memory_space<vmem>>, vector<16x128xf32>,
    %182 = tpu.iota {dimensions = array<i32: 1>} : vector<160x16xi32>
    %c0_101 = arith.constant 0 : index
    %c0_102 = arith.constant 0 : index
    %183 = vector.load %arg6[%c0_101, %c0_102] : memref<160x1xi32, #tpu.memory_space<vmem>>, vector<160x1xi32>
    %184 = vector.broadcast %183 : vector<160x1xi32> to vector<160x16xi32>
    %185 = arith.cmpi eq, %182, %184 : vector<160x16xi32>
    %186 = arith.extui %185 : vector<160x16xi1> to vector<160x16xi32>
    %187 = arith.sitofp %186 : vector<160x16xi32> to vector<160x16xf32>
    %cst_103 = arith.constant dense<0.000000e+00> : vector<160x128xf32>
    %188 = tpu.matmul %187, %178, %cst_103 {dimension_numbers = #tpu.dot_dimension_numbers<[1], [0], [0], [1], [0, 0, 1, 1], [], []>} : vector<160x16xf32>, vector<16x128xf32>, vector<160x128xf32> -> vector<160x128xf32>
    %189 = vector.extract_strided_slice %188 {offsets = [0, 0], sizes = [80, 128], strides = [1, 1]} : vector<160x128xf32> to vector<80x128xf32>
    %190 = vector.extract_strided_slice %188 {offsets = [80, 0], sizes = [80, 128], strides = [1, 1]} : vector<160x128xf32> to vector<80x128xf32>
    %191 = arith.mulf %189, %190 : vector<80x128xf32>
    %c0_104 = arith.constant 0 : index
    %c0_105 = arith.constant 0 : index
    %192 = vector.load %arg29[%c0_104, %c0_105] : memref<128x128xf32, #tpu.memory_space<vmem>>, vector<128x128xf32>
    %cst_106 = arith.constant dense<0.000000e+00> : vector<80x128xf32>
    %193 = tpu.matmul %191, %192, %cst_106 {dimension_numbers = #tpu.dot_dimension_numbers<[1], [0], [0], [1], [0, 0, 1, 1], [], []>} : vector<80x128xf32>, vector<128x128xf32>, vector<80x128xf32> -> vector<80x128xf32>
    %c0_107 = arith.constant 0 : index
    %c0_108 = arith.constant 0 : index
    %194 = vector.load %arg30[%c0_107, %c0_108] : memref<1x128xf32, #tpu.memory_space<vmem>>, vector<1x128xf32>
    %195 = vector.broadcast %194 : vector<1x128xf32> to vector<80x128xf32>
    %196 = arith.addf %193, %195 : vector<80x128xf32>
    %cst_109 = arith.constant 0.000000e+00 : f32
    %197 = vector.broadcast %cst_109 : f32 to vector<80x128xf32>
    %198 = arith.maximumf %196, %197 : vector<80x128xf32>
    %c0_110 = arith.constant 0 : index
    %c0_111 = arith.constant 0 : index
    %199 = vector.load %arg31[%c0_110, %c0_111] : memref<128x128xf32, #tpu.memory_space<vmem>>, vector<128x128xf32>
    %cst_112 = arith.constant dense<0.000000e+00> : vector<80x128xf32>
    %200 = tpu.matmul %198, %199, %cst_112 {dimension_numbers = #tpu.dot_dimension_numbers<[1], [0], [0], [1], [0, 0, 1, 1], [], []>} : vector<80x128xf32>, vector<128x128xf32>, vector<80x128xf32> -> vector<80x128xf32>
    %c0_113 = arith.constant 0 : index
    %c0_114 = arith.constant 0 : index
    %201 = vector.load %arg32[%c0_113, %c0_114] : memref<1x128xf32, #tpu.memory_space<vmem>>, vector<1x128xf32>
    %202 = vector.broadcast %201 : vector<1x128xf32> to vector<80x128xf32>
    %203 = arith.addf %200, %202 : vector<80x128xf32>
    %c0_115 = arith.constant 0 : index
    %c0_116 = arith.constant 0 : index
    %204 = vector.load %arg36[%c0_115, %c0_116] : memref<80x128xf32, #tpu.memory_space<vmem>>, vector<80x128xf32>
    tpu.vector_store %arg36[%c0_115, %c0_116], %203 {strides = array<i32>} : memref<80x128xf32, #tpu.memory_space<vmem>>, vector<80x128xf32>,
    return
  }
}

</mosaic_0001>

<llo_original>
// kernel: maskgae_forward.3
$region0: #{maskgae_forward.3}
  #allocation0 [shape = 'u32[]', space=smem, size = 0x4, offset = 0x4, fixed_abs, tag = 'smem constant byte address 0x4 - core index']
  #allocation1 [shape = 'u32[72,128]{1,0:T(1,128)}', space=vmem, size = 0x9000, scoped, tag = 'internal scratch']
  %s0 = inlined_call_operand.smem [shape: u32[37], index: -1, kind: input, shape index: {}]
  %s1 = sld [smem:[%s0]]
  %s2 = scalar_lea.smem %s0, 1
  %s3 = sld [smem:[%s2]]
  %s4 = scalar_lea.smem %s0, 2
  %s5 = sld [smem:[%s4]]
  %s6 = scalar_lea.smem %s0, 3
  %s7 = sld [smem:[%s6]]
  %s8 = scalar_lea.smem %s0, 4
  %s9 = sld [smem:[%s8]]
  %s10 = scalar_lea.smem %s0, 5
  %s11 = sld [smem:[%s10]]
  %s12 = scalar_lea.smem %s0, 6
  %s13 = sld [smem:[%s12]]
  %s14 = scalar_lea.smem %s0, 7
  %s15 = sld [smem:[%s14]]
  %s16 = scalar_lea.smem %s0, 8
  %s17 = sld [smem:[%s16]]
  %s18 = scalar_lea.smem %s0, 9
  %s19 = sld [smem:[%s18]]
  %s20 = scalar_lea.smem %s0, 10
  %s21 = sld [smem:[%s20]]
  %s22 = scalar_lea.smem %s0, 11
  %s23 = sld [smem:[%s22]]
  %s24 = scalar_lea.smem %s0, 12
  %s25 = sld [smem:[%s24]]
  %s26 = scalar_lea.smem %s0, 13
  %s27 = sld [smem:[%s26]]
  %s28 = scalar_lea.smem %s0, 14
  %s29 = sld [smem:[%s28]]
  %s30 = scalar_lea.smem %s0, 15
  %s31 = sld [smem:[%s30]]
  %s32 = scalar_lea.smem %s0, 16
  %s33 = sld [smem:[%s32]]
  %s34 = scalar_lea.smem %s0, 17
  %s35 = sld [smem:[%s34]]
  %s36 = scalar_lea.smem %s0, 18
  %s37 = sld [smem:[%s36]]
  %s38 = scalar_lea.smem %s0, 19
  %s39 = sld [smem:[%s38]]
  %s40 = scalar_lea.smem %s0, 20
  %s41 = sld [smem:[%s40]]
  %s42 = scalar_lea.smem %s0, 21
  %s43 = sld [smem:[%s42]]
  %s44 = scalar_lea.smem %s0, 22
  %s45 = sld [smem:[%s44]]
  %s46 = scalar_lea.smem %s0, 23
  %s47 = sld [smem:[%s46]]
  %s48 = scalar_lea.smem %s0, 24
  %s49 = sld [smem:[%s48]]
  %s50 = scalar_lea.smem %s0, 25
  %s51 = sld [smem:[%s50]]
  %s52 = scalar_lea.smem %s0, 26
  %s53 = sld [smem:[%s52]]
  %s54 = scalar_lea.smem %s0, 27
  %s55 = sld [smem:[%s54]]
  %s56 = scalar_lea.smem %s0, 28
  %s57 = sld [smem:[%s56]]
  %s58 = scalar_lea.smem %s0, 29
  %s59 = sld [smem:[%s58]]
  %s60 = scalar_lea.smem %s0, 30
  %s61 = sld [smem:[%s60]]
  %s62 = scalar_lea.smem %s0, 31
  %s63 = sld [smem:[%s62]]
  %s64 = scalar_lea.smem %s0, 32
  %s65 = sld [smem:[%s64]]
  %s66 = scalar_lea.smem %s0, 33
  %s67 = sld [smem:[%s66]]
  %s68 = scalar_lea.smem %s0, 34
  %s69 = sld [smem:[%s68]]
  %s70 = scalar_lea.smem %s0, 35
  %s71 = sld [smem:[%s70]]
  %s72 = scalar_lea.smem %s0, 36
  %s73 = sld [smem:[%s72]]
  %74 = xla_tuple %s67, %s69, %s71, %s73
  %s75 = sld [smem:[#allocation0]]
  $region166: #{maskgae_forward.3} parent=0
    _
  %s77 = ssub.s32 1, %s75
  %s78 = scalar_select 0, %s77, %s75
  $region1: #{maskgae_forward.3} parent=0
    #allocation2 [shape = 'u8[8192]{0}', space=vmem, size = 0x2000, scoped, tag = 'output window, operand 0, single buffered']
    #allocation3 [shape = 's32[1]{0}', space=sflag, size = 0x4, scoped, tag = 'scoped memory for maskgae_forward.3']
    #allocation4 [shape = 'u8[8192]{0}', space=vmem, size = 0x2000, scoped, tag = 'output window, operand 1, single buffered']
    #allocation5 [shape = 's32[1]{0}', space=sflag, size = 0x4, scoped, tag = 'scoped memory for maskgae_forward.3']
    #allocation6 [shape = 'u8[8192]{0}', space=vmem, size = 0x2000, scoped, tag = 'output window, operand 2, single buffered']
    %79 = vsyncpa [#allocation3], 0
    %80 = vsyncpa [#allocation5], 0
    // Predicated region
    $region2: #{maskgae_forward.3} parent=1 // pred_check
      _
    $region3: #{maskgae_forward.3} parent=1 // pred_check_branch
      %82 = sbr.rel (0) target = $region5
    $region4: #{maskgae_forward.3} parent=1 // pred_region
      _
    $region5: #{maskgae_forward.3} parent=1 // pred_fallthru
      _
    // Predicated region
    $region6: #{maskgae_forward.3} parent=1 // pred_check
      _
    $region7: #{maskgae_forward.3} parent=1 // pred_check_branch
      %84 = sbr.rel (0) target = $region9
    $region8: #{maskgae_forward.3} parent=1 // pred_region
      _
    $region9: #{maskgae_forward.3} parent=1 // pred_fallthru
      _
    // Predicated region
    $region10: #{maskgae_forward.3} parent=1 // pred_check
      _
    $region11: #{maskgae_forward.3} parent=1 // pred_check_branch
      %86 = sbr.rel (0) target = $region13
    $region12: #{maskgae_forward.3} parent=1 // pred_region
      _
    $region13: #{maskgae_forward.3} parent=1 // pred_fallthru
      _
    // Predicated region
    $region14: #{maskgae_forward.3} parent=1 // pred_check
      _
    $region15: #{maskgae_forward.3} parent=1 // pred_check_branch
      %88 = sbr.rel (0) target = $region17
    $region16: #{maskgae_forward.3} parent=1 // pred_region
      _
    $region17: #{maskgae_forward.3} parent=1 // pred_fallthru
      _
    // Predicated region
    $region18: #{maskgae_forward.3} parent=1 // pred_check
      _
    $region19: #{maskgae_forward.3} parent=1 // pred_check_branch
      %90 = sbr.rel (0) target = $region21
    $region20: #{maskgae_forward.3} parent=1 // pred_region
      _
    $region21: #{maskgae_forward.3} parent=1 // pred_fallthru
      _
    // Predicated region
    $region22: #{maskgae_forward.3} parent=1 // pred_check
      _
    $region23: #{maskgae_forward.3} parent=1 // pred_check_branch
      %92 = sbr.rel (0) target = $region25
    $region24: #{maskgae_forward.3} parent=1 // pred_region
      _
    $region25: #{maskgae_forward.3} parent=1 // pred_fallthru
      _
    // Predicated region
    $region26: #{maskgae_forward.3} parent=1 // pred_check
      _
    $region27: #{maskgae_forward.3} parent=1 // pred_check_branch
      %94 = sbr.rel (0) target = $region29
    $region28: #{maskgae_forward.3} parent=1 // pred_region
      _
    $region29: #{maskgae_forward.3} parent=1 // pred_fallthru
      _
    // Predicated region
    $region30: #{maskgae_forward.3} parent=1 // pred_check
      _
    $region31: #{maskgae_forward.3} parent=1 // pred_check_branch
      %96 = sbr.rel (0) target = $region33
    $region32: #{maskgae_forward.3} parent=1 // pred_region
      _
    $region33: #{maskgae_forward.3} parent=1 // pred_fallthru
      _
    // Predicated region
    $region34: #{maskgae_forward.3} parent=1 // pred_check
      _
    $region35: #{maskgae_forward.3} parent=1 // pred_check_branch
      %98 = sbr.rel (0) target = $region37
    $region36: #{maskgae_forward.3} parent=1 // pred_region
      _
    $region37: #{maskgae_forward.3} parent=1 // pred_fallthru
      _
    // Predicated region
    $region38: #{maskgae_forward.3} parent=1 // pred_check
      _
    $region39: #{maskgae_forward.3} parent=1 // pred_check_branch
      %100 = sbr.rel (0) target = $region41
    $region40: #{maskgae_forward.3} parent=1 // pred_region
      _
    $region41: #{maskgae_forward.3} parent=1 // pred_fallthru
      _
    // Predicated region
    $region42: #{maskgae_forward.3} parent=1 // pred_check
      _
    $region43: #{maskgae_forward.3} parent=1 // pred_check_branch
      %102 = sbr.rel (0) target = $region45
    $region44: #{maskgae_forward.3} parent=1 // pred_region
      _
    $region45: #{maskgae_forward.3} parent=1 // pred_fallthru
      _
    // Predicated region
    $region46: #{maskgae_forward.3} parent=1 // pred_check
      _
    $region47: #{maskgae_forward.3} parent=1 // pred_check_branch
      %104 = sbr.rel (0) target = $region49
    $region48: #{maskgae_forward.3} parent=1 // pred_region
      _
    $region49: #{maskgae_forward.3} parent=1 // pred_fallthru
      _
    // Predicated region
    $region50: #{maskgae_forward.3} parent=1 // pred_check
      _
    $region51: #{maskgae_forward.3} parent=1 // pred_check_branch
      %106 = sbr.rel (0) target = $region53
    $region52: #{maskgae_forward.3} parent=1 // pred_region
      _
    $region53: #{maskgae_forward.3} parent=1 // pred_fallthru
      _
    // Predicated region
    $region54: #{maskgae_forward.3} parent=1 // pred_check
      _
    $region55: #{maskgae_forward.3} parent=1 // pred_check_branch
      %108 = sbr.rel (0) target = $region57
    $region56: #{maskgae_forward.3} parent=1 // pred_region
      _
    $region57: #{maskgae_forward.3} parent=1 // pred_fallthru
      _
    // Predicated region
    $region58: #{maskgae_forward.3} parent=1 // pred_check
      _
    $region59: #{maskgae_forward.3} parent=1 // pred_check_branch
      %110 = sbr.rel (0) target = $region61
    $region60: #{maskgae_forward.3} parent=1 // pred_region
      _
    $region61: #{maskgae_forward.3} parent=1 // pred_fallthru
      _
    // Predicated region
    $region62: #{maskgae_forward.3} parent=1 // pred_check
      _
    $region63: #{maskgae_forward.3} parent=1 // pred_check_branch
      %112 = sbr.rel (0) target = $region65
    $region64: #{maskgae_forward.3} parent=1 // pred_region
      _
    $region65: #{maskgae_forward.3} parent=1 // pred_fallthru
      _
    // Predicated region
    $region66: #{maskgae_forward.3} parent=1 // pred_check
      _
    $region67: #{maskgae_forward.3} parent=1 // pred_check_branch
      %114 = sbr.rel (0) target = $region69
    $region68: #{maskgae_forward.3} parent=1 // pred_region
      _
    $region69: #{maskgae_forward.3} parent=1 // pred_fallthru
      _
    // Predicated region
    $region70: #{maskgae_forward.3} parent=1 // pred_check
      _
    $region71: #{maskgae_forward.3} parent=1 // pred_check_branch
      %116 = sbr.rel (0) target = $region73
    $region72: #{maskgae_forward.3} parent=1 // pred_region
      _
    $region73: #{maskgae_forward.3} parent=1 // pred_fallthru
      _
    // Predicated region
    $region74: #{maskgae_forward.3} parent=1 // pred_check
      _
    $region75: #{maskgae_forward.3} parent=1 // pred_check_branch
      %118 = sbr.rel (0) target = $region77
    $region76: #{maskgae_forward.3} parent=1 // pred_region
      _
    $region77: #{maskgae_forward.3} parent=1 // pred_fallthru
      _
    // Predicated region
    $region78: #{maskgae_forward.3} parent=1 // pred_check
      _
    $region79: #{maskgae_forward.3} parent=1 // pred_check_branch
      %120 = sbr.rel (0) target = $region81
    $region80: #{maskgae_forward.3} parent=1 // pred_region
      _
    $region81: #{maskgae_forward.3} parent=1 // pred_fallthru
      _
    // Predicated region
    $region82: #{maskgae_forward.3} parent=1 // pred_check
      _
    $region83: #{maskgae_forward.3} parent=1 // pred_check_branch
      %122 = sbr.rel (0) target = $region85
    $region84: #{maskgae_forward.3} parent=1 // pred_region
      _
    $region85: #{maskgae_forward.3} parent=1 // pred_fallthru
      _
    // Predicated region
    $region86: #{maskgae_forward.3} parent=1 // pred_check
      _
    $region87: #{maskgae_forward.3} parent=1 // pred_check_branch
      %124 = sbr.rel (0) target = $region89
    $region88: #{maskgae_forward.3} parent=1 // pred_region
      _
    $region89: #{maskgae_forward.3} parent=1 // pred_fallthru
      _
    // Predicated region
    $region90: #{maskgae_forward.3} parent=1 // pred_check
      _
    $region91: #{maskgae_forward.3} parent=1 // pred_check_branch
      %126 = sbr.rel (0) target = $region93
    $region92: #{maskgae_forward.3} parent=1 // pred_region
      _
    $region93: #{maskgae_forward.3} parent=1 // pred_fallthru
      _
    // Predicated region
    $region94: #{maskgae_forward.3} parent=1 // pred_check
      _
    $region95: #{maskgae_forward.3} parent=1 // pred_check_branch
      %128 = sbr.rel (0) target = $region97
    $region96: #{maskgae_forward.3} parent=1 // pred_region
      _
    $region97: #{maskgae_forward.3} parent=1 // pred_fallthru
      _
    // Predicated region
    $region98: #{maskgae_forward.3} parent=1 // pred_check
      _
    $region99: #{maskgae_forward.3} parent=1 // pred_check_branch
      %130 = sbr.rel (0) target = $region101
    $region100: #{maskgae_forward.3} parent=1 // pred_region
      _
    $region101: #{maskgae_forward.3} parent=1 // pred_fallthru
      _
    // Predicated region
    $region102: #{maskgae_forward.3} parent=1 // pred_check
      _
    $region103: #{maskgae_forward.3} parent=1 // pred_check_branch
      %132 = sbr.rel (0) target = $region105
    $region104: #{maskgae_forward.3} parent=1 // pred_region
      _
    $region105: #{maskgae_forward.3} parent=1 // pred_fallthru
      _
    // Predicated region
    $region106: #{maskgae_forward.3} parent=1 // pred_check
      _
    $region107: #{maskgae_forward.3} parent=1 // pred_check_branch
      %134 = sbr.rel (0) target = $region109
    $region108: #{maskgae_forward.3} parent=1 // pred_region
      _
    $region109: #{maskgae_forward.3} parent=1 // pred_fallthru
      _
    // Predicated region
    $region110: #{maskgae_forward.3} parent=1 // pred_check
      _
    $region111: #{maskgae_forward.3} parent=1 // pred_check_branch
      %136 = sbr.rel (0) target = $region113
    $region112: #{maskgae_forward.3} parent=1 // pred_region
      _
    $region113: #{maskgae_forward.3} parent=1 // pred_fallthru
      _
    // Predicated region
    $region114: #{maskgae_forward.3} parent=1 // pred_check
      _
    $region115: #{maskgae_forward.3} parent=1 // pred_check_branch
      %138 = sbr.rel (0) target = $region117
    $region116: #{maskgae_forward.3} parent=1 // pred_region
      _
    $region117: #{maskgae_forward.3} parent=1 // pred_fallthru
      _
    // Predicated region
    $region118: #{maskgae_forward.3} parent=1 // pred_check
      _
    $region119: #{maskgae_forward.3} parent=1 // pred_check_branch
      %140 = sbr.rel (0) target = $region121
    $region120: #{maskgae_forward.3} parent=1 // pred_region
      _
    $region121: #{maskgae_forward.3} parent=1 // pred_fallthru
      _
    // Predicated region
    $region122: #{maskgae_forward.3} parent=1 // pred_check
      _
    $region123: #{maskgae_forward.3} parent=1 // pred_check_branch
      %142 = sbr.rel (0) target = $region125
    $region124: #{maskgae_forward.3} parent=1 // pred_region
      _
    $region125: #{maskgae_forward.3} parent=1 // pred_fallthru
      _
    // Predicated region
    $region126: #{maskgae_forward.3} parent=1 // pred_check
      _
    $region127: #{maskgae_forward.3} parent=1 // pred_check_branch
      %144 = sbr.rel (0) target = $region129
    $region128: #{maskgae_forward.3} parent=1 // pred_region
      _
    $region129: #{maskgae_forward.3} parent=1 // pred_fallthru
      _
    // Predicated region
    $region130: #{maskgae_forward.3} parent=1 // pred_check
      _
    $region131: #{maskgae_forward.3} parent=1 // pred_check_branch
      %146 = sbr.rel (0) target = $region133
    $region132: #{maskgae_forward.3} parent=1 // pred_region
      _
    $region133: #{maskgae_forward.3} parent=1 // pred_fallthru
      _
    %v147 = vld [vmem:[%s1] sm:$0xff]
    %v148 = vld [vmem:[%s1 + $0x8] sm:$0xff]
    %v149 = vld [vmem:[%s15] sm:$0xff]
    %v150 = vld [vmem:[%s15 + $0x8] sm:$0xff]
    %v151 = vld [vmem:[%s15 + $0x10] sm:$0xff]
    %v152 = vld [vmem:[%s15 + $0x18] sm:$0xff]
    %v153 = vld [vmem:[%s15 + $0x20] sm:$0xff]
    %v154 = vld [vmem:[%s15 + $0x28] sm:$0xff]
    %v155 = vld [vmem:[%s15 + $0x30] sm:$0xff]
    %v156 = vld [vmem:[%s15 + $0x38] sm:$0xff]
    %v157 = vld [vmem:[%s15 + $0x40] sm:$0xff]
    %v158 = vld [vmem:[%s15 + $0x48] sm:$0xff]
    %v159 = vld [vmem:[%s15 + $0x50] sm:$0xff]
    %v160 = vld [vmem:[%s15 + $0x58] sm:$0xff]
    %v161 = vld [vmem:[%s15 + $0x60] sm:$0xff]
    %v162 = vld [vmem:[%s15 + $0x68] sm:$0xff]
    %v163 = vld [vmem:[%s15 + $0x70] sm:$0xff]
    %v164 = vld [vmem:[%s15 + $0x78] sm:$0xff]
    %v165 = vld [vmem:[%s17] sm:$0x1]
    %v167 = vperm.slane %v165, 0
    %169 = vmatpush.msra.mxu0 %v164
    %170 = vmatpush.msra.mxu0 %v163
    %171 = vmatpush.msra.mxu0 %v162
    %172 = vmatpush.msra.mxu0 %v161
    %173 = vmatpush.msra.mxu0 %v160
    %174 = vmatpush.msra.mxu0 %v159
    %175 = vmatpush.msra.mxu0 %v158
    %176 = vmatpush.msra.mxu0 %v157
    %177 = vmatpush.msra.mxu0 %v156
    %178 = vmatpush.msra.mxu0 %v155
    %179 = vmatpush.msra.mxu0 %v154
    %180 = vmatpush.msra.mxu0 %v153
    %181 = vmatpush.msra.mxu0 %v152
    %182 = vmatpush.msra.mxu0 %v151
    %183 = vmatpush.msra.mxu0 %v150
    %184 = vmatpush.msra.mxu0 %v149
    %185 = vmatmul.f32.gmra.mxu0 %v147
    %v186 = vpop.f32.mrf.mxu0
    %v187 = vadd.f32 %v167, %v186
    %188 = vmatmul.f32.gmra.mxu0 %v148
    %v189 = vpop.f32.mrf.mxu0
    %v190 = vadd.f32 %v167, %v189
    %191 = vdwg.mxu0
    %v192 = vld [vmem:[%s19] sm:$0x1]
    %v193 = vld [vmem:[%s21] sm:$0x1]
    %194 = vadd.xlane.f32.xlu0 %v187
    %v195 = vpop.xlane.xlu0 %194
    %196 = vadd.xlane.f32.xlu0 %v190
    %v197 = vpop.xlane.xlu0 %196
    %v198 = vmul.f32 %v195, 0.03125
    %v199 = vmul.f32 %v197, 0.03125
    %v200 = vmul.f32 %v187, %v187
    %v201 = vmul.f32 %v190, %v190
    %202 = vadd.xlane.f32.xlu0 %v200
    %v203 = vpop.xlane.xlu0 %202
    %204 = vadd.xlane.f32.xlu0 %v201
    %v205 = vpop.xlane.xlu0 %204
    %v206 = vmul.f32 %v203, 0.03125
    %v207 = vmul.f32 %v205, 0.03125
    %v208 = vmul.f32 %v198, %v198
    %v209 = vmul.f32 %v199, %v199
    %v210 = vsub.f32 %v206, %v208
    %v211 = vsub.f32 %v207, %v209
    %v212 = vsub.f32 %v187, %v198
    %v213 = vsub.f32 %v190, %v199
    %v214 = vadd.f32 %v210, 1e-05
    %v215 = vadd.f32 %v211, 1e-05
    %v216 = vrsqrt.pop %v214
    %v217 = vmul.f32 %v216, %v214
    %v218 = vmul.f32 %v217, %v216
    %v219 = vmul.f32 0.5, %v218
    %v220 = vsub.f32 1.5, %v219
    %v221 = vmul.f32 %v216, %v220
    %vm222 = vweird.f32 %v214
    %vm223 = vweird.f32 %v216
    %vm224 = vmor %vm222, %vm223
    %v225 = vsel %vm224, %v216, %v221
    %v226 = vrsqrt.pop %v215
    %v227 = vmul.f32 %v226, %v215
    %v228 = vmul.f32 %v227, %v226
    %v229 = vmul.f32 0.5, %v228
    %v230 = vsub.f32 1.5, %v229
    %v231 = vmul.f32 %v226, %v230
    %vm232 = vweird.f32 %v215
    %vm233 = vweird.f32 %v226
    %vm234 = vmor %vm232, %vm233
    %v235 = vsel %vm234, %v226, %v231
    %v236 = vmul.f32 %v212, %v225
    %v237 = vmul.f32 %v213, %v235
    %v239 = vperm.slane %v192, 0
    %v241 = vmul.f32 %v236, %v239
    %v242 = vmul.f32 %v237, %v239
    %v244 = vperm.slane %v193, 0
    %v246 = vadd.f32 %v241, %v244
    %v247 = vadd.f32 %v242, %v244
    %v248 = vmul.f32 %v246, 0.5
    %v249 = vmul.f32 %v247, 0.5
    %v250 = vmul.f32 %v246, 0.044715
    %v251 = vmul.f32 %v247, 0.044715
    %v252 = vmul.f32 %v250, %v246
    %v253 = vmul.f32 %v251, %v247
    %v254 = vmul.f32 %v252, %v246
    %v255 = vmul.f32 %v253, %v247
    %v256 = vadd.f32 %v246, %v254
    %v257 = vadd.f32 %v247, %v255
    %v258 = vmul.f32 %v256, 0.7978846
    %v259 = vmul.f32 %v257, 0.7978846
    %v260 = vtanh.pop %v258
    %v261 = vtanh.pop %v259
    %v262 = vadd.f32 %v260, 1.0
    %v263 = vadd.f32 %v261, 1.0
    %v264 = vmul.f32 %v248, %v262
    %v265 = vmul.f32 %v249, %v263
    %v266 = vld [vmem:[%s23] sm:$0xff]
    %v267 = vld [vmem:[%s23 + $0x8] sm:$0xff]
    %v268 = vld [vmem:[%s23 + $0x10] sm:$0xff]
    %v269 = vld [vmem:[%s23 + $0x18] sm:$0xff]
    %v270 = vld [vmem:[%s23 + $0x20] sm:$0xff]
    %v271 = vld [vmem:[%s23 + $0x28] sm:$0xff]
    %v272 = vld [vmem:[%s23 + $0x30] sm:$0xff]
    %v273 = vld [vmem:[%s23 + $0x38] sm:$0xff]
    %v274 = vld [vmem:[%s23 + $0x40] sm:$0xff]
    %v275 = vld [vmem:[%s23 + $0x48] sm:$0xff]
    %v276 = vld [vmem:[%s23 + $0x50] sm:$0xff]
    %v277 = vld [vmem:[%s23 + $0x58] sm:$0xff]
    %v278 = vld [vmem:[%s23 + $0x60] sm:$0xff]
    %v279 = vld [vmem:[%s23 + $0x68] sm:$0xff]
    %v280 = vld [vmem:[%s23 + $0x70] sm:$0xff]
    %v281 = vld [vmem:[%s23 + $0x78] sm:$0xff]
    %v282 = vld [vmem:[%s25] sm:$0x1]
    %v284 = vperm.slane %v282, 0
    %286 = vmatpush.msra.mxu0 %v281
    %287 = vmatpush.msra.mxu0 %v280
    %288 = vmatpush.msra.mxu0 %v279
    %289 = vmatpush.msra.mxu0 %v278
    %290 = vmatpush.msra.mxu0 %v277
    %291 = vmatpush.msra.mxu0 %v276
    %292 = vmatpush.msra.mxu0 %v275
    %293 = vmatpush.msra.mxu0 %v274
    %294 = vmatpush.msra.mxu0 %v273
    %295 = vmatpush.msra.mxu0 %v272
    %296 = vmatpush.msra.mxu0 %v271
    %297 = vmatpush.msra.mxu0 %v270
    %298 = vmatpush.msra.mxu0 %v269
    %299 = vmatpush.msra.mxu0 %v268
    %300 = vmatpush.msra.mxu0 %v267
    %301 = vmatpush.msra.mxu0 %v266
    %302 = vmatmul.f32.gmra.mxu0 %v264
    %v303 = vpop.f32.mrf.mxu0
    %v304 = vadd.f32 %v284, %v303
    %305 = vmatmul.f32.gmra.mxu0 %v265
    %v306 = vpop.f32.mrf.mxu0
    %v307 = vadd.f32 %v284, %v306
    %308 = vdwg.mxu0
    %v309 = vld [vmem:[%s27] sm:$0x1]
    %v310 = vld [vmem:[%s29] sm:$0x1]
    %311 = vadd.xlane.f32.xlu0 %v304
    %v312 = vpop.xlane.xlu0 %311
    %313 = vadd.xlane.f32.xlu0 %v307
    %v314 = vpop.xlane.xlu0 %313
    %v315 = vmul.f32 %v312, 0.03125
    %v316 = vmul.f32 %v314, 0.03125
    %v317 = vmul.f32 %v304, %v304
    %v318 = vmul.f32 %v307, %v307
    %319 = vadd.xlane.f32.xlu0 %v317
    %v320 = vpop.xlane.xlu0 %319
    %321 = vadd.xlane.f32.xlu0 %v318
    %v322 = vpop.xlane.xlu0 %321
    %v323 = vmul.f32 %v320, 0.03125
    %v324 = vmul.f32 %v322, 0.03125
    %v325 = vmul.f32 %v315, %v315
    %v326 = vmul.f32 %v316, %v316
    %v327 = vsub.f32 %v323, %v325
    %v328 = vsub.f32 %v324, %v326
    %v329 = vsub.f32 %v304, %v315
    %v330 = vsub.f32 %v307, %v316
    %v331 = vadd.f32 %v327, 1e-05
    %v332 = vadd.f32 %v328, 1e-05
    %v333 = vrsqrt.pop %v331
    %v334 = vmul.f32 %v333, %v331
    %v335 = vmul.f32 %v334, %v333
    %v336 = vmul.f32 0.5, %v335
    %v337 = vsub.f32 1.5, %v336
    %v338 = vmul.f32 %v333, %v337
    %vm339 = vweird.f32 %v331
    %vm340 = vweird.f32 %v333
    %vm341 = vmor %vm339, %vm340
    %v342 = vsel %vm341, %v333, %v338
    %v343 = vrsqrt.pop %v332
    %v344 = vmul.f32 %v343, %v332
    %v345 = vmul.f32 %v344, %v343
    %v346 = vmul.f32 0.5, %v345
    %v347 = vsub.f32 1.5, %v346
    %v348 = vmul.f32 %v343, %v347
    %vm349 = vweird.f32 %v332
    %vm350 = vweird.f32 %v343
    %vm351 = vmor %vm349, %vm350
    %v352 = vsel %vm351, %v343, %v348
    %v353 = vmul.f32 %v329, %v342
    %v354 = vmul.f32 %v330, %v352
    %v356 = vperm.slane %v309, 0
    %v358 = vmul.f32 %v353, %v356
    %v359 = vmul.f32 %v354, %v356
    %v361 = vperm.slane %v310, 0
    %v363 = vadd.f32 %v358, %v361
    %v364 = vadd.f32 %v359, %v361
    %v365 = vmul.f32 %v363, 0.5
    %v366 = vmul.f32 %v364, 0.5
    %v367 = vmul.f32 %v363, 0.044715
    %v368 = vmul.f32 %v364, 0.044715
    %v369 = vmul.f32 %v367, %v363
    %v370 = vmul.f32 %v368, %v364
    %v371 = vmul.f32 %v369, %v363
    %v372 = vmul.f32 %v370, %v364
    %v373 = vadd.f32 %v363, %v371
    %v374 = vadd.f32 %v364, %v372
    %v375 = vmul.f32 %v373, 0.7978846
    %v376 = vmul.f32 %v374, 0.7978846
    %v377 = vtanh.pop %v375
    %v378 = vtanh.pop %v376
    %v379 = vadd.f32 %v377, 1.0
    %v380 = vadd.f32 %v378, 1.0
    %v381 = vmul.f32 %v365, %v379
    %v382 = vmul.f32 %v366, %v380
    %v383 = vld [vmem:[%s9] sm:$0xff]
    %v384 = vld [vmem:[%s9 + $0x8] sm:$0xff]
    %v385 = vld [vmem:[%s9 + $0x10] sm:$0xff]
    %v386 = vld [vmem:[%s9 + $0x18] sm:$0xff]
    %v387 = vld [vmem:[%s9 + $0x20] sm:$0xff]
    %v388 = vld [vmem:[%s9 + $0x28] sm:$0xff]
    %v389 = vld [vmem:[%s9 + $0x30] sm:$0xff]
    %v390 = vld [vmem:[%s9 + $0x38] sm:$0xff]
    %v391 = vld [vmem:[%s9 + $0x40] sm:$0xff]
    %v392 = vld [vmem:[%s9 + $0x48] sm:$0xff]
    %v393 = vlaneseq
    %v394 = vand.u32 %v393, 127
    %395 = vset.pattern.permute.xlu0 0
    %396 = vperm.xlu0 %395, %v383
    %v397 = vpop.permute.xlu0 %396
    %398 = vset.pattern.permute.xlu0 0
    %399 = vperm.xlu0 %398, %v384
    %v400 = vpop.permute.xlu0 %399
    %401 = vset.pattern.permute.xlu0 0
    %402 = vperm.xlu0 %401, %v385
    %v403 = vpop.permute.xlu0 %402
    %404 = vset.pattern.permute.xlu0 0
    %405 = vperm.xlu0 %404, %v386
    %v406 = vpop.permute.xlu0 %405
    %407 = vset.pattern.permute.xlu0 0
    %408 = vperm.xlu0 %407, %v387
    %v409 = vpop.permute.xlu0 %408
    %410 = vset.pattern.permute.xlu0 0
    %411 = vperm.xlu0 %410, %v388
    %v412 = vpop.permute.xlu0 %411
    %413 = vset.pattern.permute.xlu0 0
    %414 = vperm.xlu0 %413, %v389
    %v415 = vpop.permute.xlu0 %414
    %416 = vset.pattern.permute.xlu0 0
    %417 = vperm.xlu0 %416, %v390
    %v418 = vpop.permute.xlu0 %417
    %419 = vset.pattern.permute.xlu0 0
    %420 = vperm.xlu0 %419, %v391
    %v421 = vpop.permute.xlu0 %420
    %422 = vset.pattern.permute.xlu0 0
    %423 = vperm.xlu0 %422, %v392
    %v424 = vpop.permute.xlu0 %423
    %vm425 = vcmp.eq.s32.totalorder %v394, %v397
    %vm426 = vcmp.eq.s32.totalorder %v394, %v400
    %vm427 = vcmp.eq.s32.totalorder %v394, %v403
    %vm428 = vcmp.eq.s32.totalorder %v394, %v406
    %vm429 = vcmp.eq.s32.totalorder %v394, %v409
    %vm430 = vcmp.eq.s32.totalorder %v394, %v412
    %vm431 = vcmp.eq.s32.totalorder %v394, %v415
    %vm432 = vcmp.eq.s32.totalorder %v394, %v418
    %vm433 = vcmp.eq.s32.totalorder %v394, %v421
    %vm434 = vcmp.eq.s32.totalorder %v394, %v424
    %v435 = vsel %vm425, 1, 0
    %v436 = vsel %vm426, 1, 0
    %v437 = vsel %vm427, 1, 0
    %v438 = vsel %vm428, 1, 0
    %v439 = vsel %vm429, 1, 0
    %v440 = vsel %vm430, 1, 0
    %v441 = vsel %vm431, 1, 0
    %v442 = vsel %vm432, 1, 0
    %v443 = vsel %vm433, 1, 0
    %v444 = vsel %vm434, 1, 0
    %v445 = vcvt.s32.f32 %v435
    %v446 = vcvt.s32.f32 %v436
    %v447 = vcvt.s32.f32 %v437
    %v448 = vcvt.s32.f32 %v438
    %v449 = vcvt.s32.f32 %v439
    %v450 = vcvt.s32.f32 %v440
    %v451 = vcvt.s32.f32 %v441
    %v452 = vcvt.s32.f32 %v442
    %v453 = vcvt.s32.f32 %v443
    %v454 = vcvt.s32.f32 %v444
    %vm455 = vcmask 130048
    %v457 = vsel %vm455, %v445, 0
    %v460 = vsel %vm455, %v446, 0
    %v463 = vsel %vm455, %v447, 0
    %v466 = vsel %vm455, %v448, 0
    %v469 = vsel %vm455, %v449, 0
    %v472 = vsel %vm455, %v450, 0
    %v475 = vsel %vm455, %v451, 0
    %v478 = vsel %vm455, %v452, 0
    %v481 = vsel %vm455, %v453, 0
    %v484 = vsel %vm455, %v454, 0
    %486 = vmatpush.msra.mxu0 0.0
    %487 = vmatpush.msra.mxu0 0.0
    %488 = vmatpush.msra.mxu0 0.0
    %489 = vmatpush.msra.mxu0 0.0
    %490 = vmatpush.msra.mxu0 0.0
    %491 = vmatpush.msra.mxu0 0.0
    %492 = vmatpush.msra.mxu0 0.0
    %493 = vmatpush.msra.mxu0 0.0
    %494 = vmatpush.msra.mxu0 0.0
    %495 = vmatpush.msra.mxu0 0.0
    %496 = vmatpush.msra.mxu0 0.0
    %497 = vmatpush.msra.mxu0 0.0
    %498 = vmatpush.msra.mxu0 0.0
    %499 = vmatpush.msra.mxu0 0.0
    %500 = vmatpush.msra.mxu0 %v382
    %501 = vmatpush.msra.mxu0 %v381
    %502 = vmatmul.f32.gmra.mxu0 %v457
    %v503 = vpop.f32.mrf.mxu0
    %v504 = vadd.f32 0.0, %v503
    %505 = vmatmul.f32.gmra.mxu0 %v460
    %v506 = vpop.f32.mrf.mxu0
    %v507 = vadd.f32 0.0, %v506
    %508 = vmatmul.f32.gmra.mxu0 %v463
    %v509 = vpop.f32.mrf.mxu0
    %v510 = vadd.f32 0.0, %v509
    %511 = vmatmul.f32.gmra.mxu0 %v466
    %v512 = vpop.f32.mrf.mxu0
    %v513 = vadd.f32 0.0, %v512
    %514 = vmatmul.f32.gmra.mxu0 %v469
    %v515 = vpop.f32.mrf.mxu0
    %v516 = vadd.f32 0.0, %v515
    %517 = vmatmul.f32.gmra.mxu0 %v472
    %v518 = vpop.f32.mrf.mxu0
    %v519 = vadd.f32 0.0, %v518
    %520 = vmatmul.f32.gmra.mxu0 %v475
    %v521 = vpop.f32.mrf.mxu0
    %v522 = vadd.f32 0.0, %v521
    %523 = vmatmul.f32.gmra.mxu0 %v478
    %v524 = vpop.f32.mrf.mxu0
    %v525 = vadd.f32 0.0, %v524
    %526 = vmatmul.f32.gmra.mxu0 %v481
    %v527 = vpop.f32.mrf.mxu0
    %v528 = vadd.f32 0.0, %v527
    %529 = vmatmul.f32.gmra.mxu0 %v484
    %v530 = vpop.f32.mrf.mxu0
    %v531 = vadd.f32 0.0, %v530
    %532 = vdwg.mxu0
    %v533 = vld [vmem:[%s5] sm:$0xff]
    %v534 = vld [vmem:[%s5 + $0x8] sm:$0xff]
    %535 = vmatpush.msra.mxu0 0.0
    %536 = vmatpush.msra.mxu0 0.0
    %537 = vmatpush.msra.mxu0 0.0
    %538 = vmatpush.msra.mxu0 0.0
    %539 = vmatpush.msra.mxu0 0.0
    %540 = vmatpush.msra.mxu0 0.0
    %541 = vmatpush.msra.mxu0 0.0
    %542 = vmatpush.msra.mxu0 0.0
    %543 = vmatpush.msra.mxu0 0.0
    %544 = vmatpush.msra.mxu0 0.0
    %545 = vmatpush.msra.mxu0 0.0
    %546 = vmatpush.msra.mxu0 0.0
    %547 = vmatpush.msra.mxu0 0.0
    %548 = vmatpush.msra.mxu0 0.0
    %549 = vmatpush.msra.mxu0 %v534
    %550 = vmatpush.msra.mxu0 %v533
    %551 = vmatmul.f32.gmra.mxu0 %v457
    %v552 = vpop.f32.mrf.mxu0
    %v553 = vadd.f32 0.0, %v552
    %554 = vmatmul.f32.gmra.mxu0 %v460
    %v555 = vpop.f32.mrf.mxu0
    %v556 = vadd.f32 0.0, %v555
    %557 = vmatmul.f32.gmra.mxu0 %v463
    %v558 = vpop.f32.mrf.mxu0
    %v559 = vadd.f32 0.0, %v558
    %560 = vmatmul.f32.gmra.mxu0 %v466
    %v561 = vpop.f32.mrf.mxu0
    %v562 = vadd.f32 0.0, %v561
    %563 = vmatmul.f32.gmra.mxu0 %v469
    %v564 = vpop.f32.mrf.mxu0
    %v565 = vadd.f32 0.0, %v564
    %566 = vmatmul.f32.gmra.mxu0 %v472
    %v567 = vpop.f32.mrf.mxu0
    %v568 = vadd.f32 0.0, %v567
    %569 = vmatmul.f32.gmra.mxu0 %v475
    %v570 = vpop.f32.mrf.mxu0
    %v571 = vadd.f32 0.0, %v570
    %572 = vmatmul.f32.gmra.mxu0 %v478
    %v573 = vpop.f32.mrf.mxu0
    %v574 = vadd.f32 0.0, %v573
    %575 = vmatmul.f32.gmra.mxu0 %v481
    %v576 = vpop.f32.mrf.mxu0
    %v577 = vadd.f32 0.0, %v576
    %578 = vmatmul.f32.gmra.mxu0 %v484
    %v579 = vpop.f32.mrf.mxu0
    %v580 = vadd.f32 0.0, %v579
    %581 = vdwg.mxu0
    %v582 = vsub.f32 %v553, %v568
    %v583 = vsub.f32 %v556, %v571
    %v584 = vsub.f32 %v559, %v574
    %v585 = vsub.f32 %v562, %v577
    %v586 = vsub.f32 %v565, %v580
    %v587 = vmul.f32 %v582, %v582
    %v588 = vmul.f32 %v583, %v583
    %v589 = vmul.f32 %v584, %v584
    %v590 = vmul.f32 %v585, %v585
    %v591 = vmul.f32 %v586, %v586
    %592 = vadd.xlane.f32.xlu0 %v587
    %v593 = vpop.xlane.xlu0 %592
    %594 = vadd.xlane.f32.xlu0 %v588
    %v595 = vpop.xlane.xlu0 %594
    %596 = vadd.xlane.f32.xlu0 %v589
    %v597 = vpop.xlane.xlu0 %596
    %598 = vadd.xlane.f32.xlu0 %v590
    %v599 = vpop.xlane.xlu0 %598
    %600 = vadd.xlane.f32.xlu0 %v591
    %v601 = vpop.xlane.xlu0 %600
    %v602 = vld [vmem:[%s31] sm:$0xff]
    %v603 = vld [vmem:[%s31 + $0x8] sm:$0xff]
    %v604 = vld [vmem:[%s31 + $0x10] sm:$0xff]
    %v605 = vld [vmem:[%s31 + $0x18] sm:$0xff]
    %v606 = vld [vmem:[%s31 + $0x20] sm:$0xff]
    %v607 = vld [vmem:[%s31 + $0x28] sm:$0xff]
    %v608 = vld [vmem:[%s31 + $0x30] sm:$0xff]
    %v609 = vld [vmem:[%s31 + $0x38] sm:$0xff]
    %v610 = vld [vmem:[%s31 + $0x40] sm:$0xff]
    %v611 = vld [vmem:[%s31 + $0x48] sm:$0xff]
    %v612 = vld [vmem:[%s31 + $0x50] sm:$0xff]
    %v613 = vld [vmem:[%s31 + $0x58] sm:$0xff]
    %v614 = vld [vmem:[%s31 + $0x60] sm:$0xff]
    %v615 = vld [vmem:[%s31 + $0x68] sm:$0xff]
    %v616 = vld [vmem:[%s31 + $0x70] sm:$0xff]
    %v617 = vld [vmem:[%s31 + $0x78] sm:$0xff]
    %v618 = vld [vmem:[%s33] sm:$0xff]
    %v619 = vld [vmem:[%s33 + $0x8] sm:$0xff]
    %v620 = vld [vmem:[%s33 + $0x10] sm:$0xff]
    %v621 = vld [vmem:[%s33 + $0x18] sm:$0xff]
    %v622 = vld [vmem:[%s33 + $0x20] sm:$0xff]
    %v623 = vld [vmem:[%s33 + $0x28] sm:$0xff]
    %v624 = vld [vmem:[%s33 + $0x30] sm:$0xff]
    %v625 = vld [vmem:[%s33 + $0x38] sm:$0xff]
    %v626 = vld [vmem:[%s33 + $0x40] sm:$0xff]
    %v627 = vld [vmem:[%s33 + $0x48] sm:$0xff]
    %v628 = vld [vmem:[%s33 + $0x50] sm:$0xff]
    %v629 = vld [vmem:[%s33 + $0x58] sm:$0xff]
    %v630 = vld [vmem:[%s33 + $0x60] sm:$0xff]
    %v631 = vld [vmem:[%s33 + $0x68] sm:$0xff]
    %v632 = vld [vmem:[%s33 + $0x70] sm:$0xff]
    %v633 = vld [vmem:[%s33 + $0x78] sm:$0xff]
    %634 = vmatpush.msra.mxu0 %v633
    %635 = vmatpush.msra.mxu0 %v632
    %636 = vmatpush.msra.mxu0 %v631
    %637 = vmatpush.msra.mxu0 %v630
    %638 = vmatpush.msra.mxu0 %v629
    %639 = vmatpush.msra.mxu0 %v628
    %640 = vmatpush.msra.mxu0 %v627
    %641 = vmatpush.msra.mxu0 %v626
    %642 = vmatpush.msra.mxu0 %v625
    %643 = vmatpush.msra.mxu0 %v624
    %644 = vmatpush.msra.mxu0 %v623
    %645 = vmatpush.msra.mxu0 %v622
    %646 = vmatpush.msra.mxu0 %v621
    %647 = vmatpush.msra.mxu0 %v620
    %648 = vmatpush.msra.mxu0 %v619
    %649 = vmatpush.msra.mxu0 %v618
    %650 = vmatmul.f32.gmra.mxu0 %v519
    %v651 = vpop.f32.mrf.mxu0
    %v652 = vadd.f32 0.0, %v651
    %653 = vmatmul.f32.gmra.mxu0 %v522
    %v654 = vpop.f32.mrf.mxu0
    %v655 = vadd.f32 0.0, %v654
    %656 = vmatmul.f32.gmra.mxu0 %v525
    %v657 = vpop.f32.mrf.mxu0
    %v658 = vadd.f32 0.0, %v657
    %659 = vmatmul.f32.gmra.mxu0 %v528
    %v660 = vpop.f32.mrf.mxu0
    %v661 = vadd.f32 0.0, %v660
    %662 = vmatmul.f32.gmra.mxu0 %v531
    %v663 = vpop.f32.mrf.mxu0
    %v664 = vadd.f32 0.0, %v663
    %665 = vdwg.mxu0
    %666 = vmatpush.msra.mxu0 %v617
    %667 = vmatpush.msra.mxu0 %v616
    %668 = vmatpush.msra.mxu0 %v615
    %669 = vmatpush.msra.mxu0 %v614
    %670 = vmatpush.msra.mxu0 %v613
    %671 = vmatpush.msra.mxu0 %v612
    %672 = vmatpush.msra.mxu0 %v611
    %673 = vmatpush.msra.mxu0 %v610
    %674 = vmatpush.msra.mxu0 %v609
    %675 = vmatpush.msra.mxu0 %v608
    %676 = vmatpush.msra.mxu0 %v607
    %677 = vmatpush.msra.mxu0 %v606
    %678 = vmatpush.msra.mxu0 %v605
    %679 = vmatpush.msra.mxu0 %v604
    %680 = vmatpush.msra.mxu0 %v603
    %681 = vmatpush.msra.mxu0 %v602
    %682 = vmatmul.f32.gmra.mxu0 %v504
    %v683 = vpop.f32.mrf.mxu0
    %v684 = vadd.f32 %v652, %v683
    %685 = vmatmul.f32.gmra.mxu0 %v507
    %v686 = vpop.f32.mrf.mxu0
    %v687 = vadd.f32 %v655, %v686
    %688 = vmatmul.f32.gmra.mxu0 %v510
    %v689 = vpop.f32.mrf.mxu0
    %v690 = vadd.f32 %v658, %v689
    %691 = vmatmul.f32.gmra.mxu0 %v513
    %v692 = vpop.f32.mrf.mxu0
    %v693 = vadd.f32 %v661, %v692
    %694 = vmatmul.f32.gmra.mxu0 %v516
    %v695 = vpop.f32.mrf.mxu0
    %v696 = vadd.f32 %v664, %v695
    %697 = vdwg.mxu0
    %v698 = vld [vmem:[%s35] sm:$0x1]
    %v700 = vperm.slane %v698, 0
    %v702 = vmul.f32 %v593, %v700
    %v703 = vmul.f32 %v595, %v700
    %v704 = vmul.f32 %v597, %v700
    %v705 = vmul.f32 %v599, %v700
    %v706 = vmul.f32 %v601, %v700
    %v707 = vadd.f32 %v684, %v702
    %v708 = vadd.f32 %v687, %v703
    %v709 = vadd.f32 %v690, %v704
    %v710 = vadd.f32 %v693, %v705
    %v711 = vadd.f32 %v696, %v706
    %v712 = vld [vmem:[%s3] sm:$0xff]
    %v713 = vld [vmem:[%s3 + $0x8] sm:$0xff]
    %v714 = vld [vmem:[%s3 + $0x10] sm:$0xff]
    %v715 = vld [vmem:[%s3 + $0x18] sm:$0xff]
    %v716 = vld [vmem:[%s3 + $0x20] sm:$0xff]
    %v717 = vld [vmem:[%s37] sm:$0xff]
    %v718 = vld [vmem:[%s37 + $0x8] sm:$0xff]
    %v719 = vld [vmem:[%s37 + $0x10] sm:$0xff]
    %v720 = vld [vmem:[%s37 + $0x18] sm:$0xff]
    %v721 = vld [vmem:[%s37 + $0x20] sm:$0xff]
    %v722 = vld [vmem:[%s37 + $0x28] sm:$0xff]
    %v723 = vld [vmem:[%s37 + $0x30] sm:$0xff]
    %v724 = vld [vmem:[%s37 + $0x38] sm:$0xff]
    %v725 = vld [vmem:[%s37 + $0x40] sm:$0xff]
    %v726 = vld [vmem:[%s37 + $0x48] sm:$0xff]
    %v727 = vld [vmem:[%s37 + $0x50] sm:$0xff]
    %v728 = vld [vmem:[%s37 + $0x58] sm:$0xff]
    %v729 = vld [vmem:[%s37 + $0x60] sm:$0xff]
    %v730 = vld [vmem:[%s37 + $0x68] sm:$0xff]
    %v731 = vld [vmem:[%s37 + $0x70] sm:$0xff]
    %v732 = vld [vmem:[%s37 + $0x78] sm:$0xff]
    %733 = vmatpush.msra.mxu0 %v732
    %734 = vmatpush.msra.mxu0 %v731
    %735 = vmatpush.msra.mxu0 %v730
    %736 = vmatpush.msra.mxu0 %v729
    %737 = vmatpush.msra.mxu0 %v728
    %738 = vmatpush.msra.mxu0 %v727
    %739 = vmatpush.msra.mxu0 %v726
    %740 = vmatpush.msra.mxu0 %v725
    %741 = vmatpush.msra.mxu0 %v724
    %742 = vmatpush.msra.mxu0 %v723
    %743 = vmatpush.msra.mxu0 %v722
    %744 = vmatpush.msra.mxu0 %v721
    %745 = vmatpush.msra.mxu0 %v720
    %746 = vmatpush.msra.mxu0 %v719
    %747 = vmatpush.msra.mxu0 %v718
    %748 = vmatpush.msra.mxu0 %v717
    %749 = vmatmul.f32.gmra.mxu0 %v712
    %v750 = vpop.f32.mrf.mxu0
    %v751 = vadd.f32 0.0, %v750
    %752 = vmatmul.f32.gmra.mxu0 %v713
    %v753 = vpop.f32.mrf.mxu0
    %v754 = vadd.f32 0.0, %v753
    %755 = vmatmul.f32.gmra.mxu0 %v714
    %v756 = vpop.f32.mrf.mxu0
    %v757 = vadd.f32 0.0, %v756
    %758 = vmatmul.f32.gmra.mxu0 %v715
    %v759 = vpop.f32.mrf.mxu0
    %v760 = vadd.f32 0.0, %v759
    %761 = vmatmul.f32.gmra.mxu0 %v716
    %v762 = vpop.f32.mrf.mxu0
    %v763 = vadd.f32 0.0, %v762
    %764 = vdwg.mxu0
    %v765 = vadd.f32 %v707, %v751
    %v766 = vadd.f32 %v708, %v754
    %v767 = vadd.f32 %v709, %v757
    %v768 = vadd.f32 %v710, %v760
    %v769 = vadd.f32 %v711, %v763
    %v770 = vld [vmem:[%s39] sm:$0x1]
    %v772 = vperm.slane %v770, 0
    %v774 = vadd.f32 %v765, %v772
    %v775 = vadd.f32 %v766, %v772
    %v776 = vadd.f32 %v767, %v772
    %v777 = vadd.f32 %v768, %v772
    %v778 = vadd.f32 %v769, %v772
    %v779 = vsub.f32 0.0, %v774
    %v780 = vsub.f32 0.0, %v775
    %v781 = vsub.f32 0.0, %v776
    %v782 = vsub.f32 0.0, %v777
    %v783 = vsub.f32 0.0, %v778
    %v784 = vmul.f32 %v779, 1.442695
    %v785 = vpow.pop %v784
    %v786 = vmul.f32 %v780, 1.442695
    %v787 = vpow.pop %v786
    %v788 = vmul.f32 %v781, 1.442695
    %v789 = vpow.pop %v788
    %v790 = vmul.f32 %v782, 1.442695
    %v791 = vpow.pop %v790
    %v792 = vmul.f32 %v783, 1.442695
    %v793 = vpow.pop %v792
    %v794 = vadd.f32 %v785, 1.0
    %v795 = vadd.f32 %v787, 1.0
    %v796 = vadd.f32 %v789, 1.0
    %v797 = vadd.f32 %v791, 1.0
    %v798 = vadd.f32 %v793, 1.0
    %v799 = vrcp.pop %v794
    %v800 = vmul.f32 %v794, %v799
    %v801 = vsub.f32 1.0, %v800
    %v802 = vmul.f32 %v799, %v801
    %v803 = vadd.f32 %v799, %v802
    %vm804 = vweird.f32 %v794
    %vm805 = vweird.f32 %v799
    %vm806 = vmor %vm804, %vm805
    %v807 = vsel %vm806, %v799, %v803
    %v808 = vand.u32 2147483647, %v794
    %vm809 = vcmp.eq.f32.partialorder %v808, 8.507059e+37
    %v810 = vand.u32 %v794, 2147483648
    %v811 = vor.u32 1.1754944e-38, %v810
    %v812 = vsel %vm809, %v811, %v807
    %v813 = vmul.f32 1.0, %v812
    %v814 = vrcp.pop %v795
    %v815 = vmul.f32 %v795, %v814
    %v816 = vsub.f32 1.0, %v815
    %v817 = vmul.f32 %v814, %v816
    %v818 = vadd.f32 %v814, %v817
    %vm819 = vweird.f32 %v795
    %vm820 = vweird.f32 %v814
    %vm821 = vmor %vm819, %vm820
    %v822 = vsel %vm821, %v814, %v818
    %v823 = vand.u32 2147483647, %v795
    %vm824 = vcmp.eq.f32.partialorder %v823, 8.507059e+37
    %v825 = vand.u32 %v795, 2147483648
    %v826 = vor.u32 1.1754944e-38, %v825
    %v827 = vsel %vm824, %v826, %v822
    %v828 = vmul.f32 1.0, %v827
    %v829 = vrcp.pop %v796
    %v830 = vmul.f32 %v796, %v829
    %v831 = vsub.f32 1.0, %v830
    %v832 = vmul.f32 %v829, %v831
    %v833 = vadd.f32 %v829, %v832
    %vm834 = vweird.f32 %v796
    %vm835 = vweird.f32 %v829
    %vm836 = vmor %vm834, %vm835
    %v837 = vsel %vm836, %v829, %v833
    %v838 = vand.u32 2147483647, %v796
    %vm839 = vcmp.eq.f32.partialorder %v838, 8.507059e+37
    %v840 = vand.u32 %v796, 2147483648
    %v841 = vor.u32 1.1754944e-38, %v840
    %v842 = vsel %vm839, %v841, %v837
    %v843 = vmul.f32 1.0, %v842
    %v844 = vrcp.pop %v797
    %v845 = vmul.f32 %v797, %v844
    %v846 = vsub.f32 1.0, %v845
    %v847 = vmul.f32 %v844, %v846
    %v848 = vadd.f32 %v844, %v847
    %vm849 = vweird.f32 %v797
    %vm850 = vweird.f32 %v844
    %vm851 = vmor %vm849, %vm850
    %v852 = vsel %vm851, %v844, %v848
    %v853 = vand.u32 2147483647, %v797
    %vm854 = vcmp.eq.f32.partialorder %v853, 8.507059e+37
    %v855 = vand.u32 %v797, 2147483648
    %v856 = vor.u32 1.1754944e-38, %v855
    %v857 = vsel %vm854, %v856, %v852
    %v858 = vmul.f32 1.0, %v857
    %v859 = vrcp.pop %v798
    %v860 = vmul.f32 %v798, %v859
    %v861 = vsub.f32 1.0, %v860
    %v862 = vmul.f32 %v859, %v861
    %v863 = vadd.f32 %v859, %v862
    %vm864 = vweird.f32 %v798
    %vm865 = vweird.f32 %v859
    %vm866 = vmor %vm864, %vm865
    %v867 = vsel %vm866, %v859, %v863
    %v868 = vand.u32 2147483647, %v798
    %vm869 = vcmp.eq.f32.partialorder %v868, 8.507059e+37
    %v870 = vand.u32 %v798, 2147483648
    %v871 = vor.u32 1.1754944e-38, %v870
    %v872 = vsel %vm869, %v871, %v867
    %v873 = vmul.f32 1.0, %v872
    %v874 = vmul.f32 %v774, %v813
    %v875 = vmul.f32 %v775, %v828
    %v876 = vmul.f32 %v776, %v843
    %v877 = vmul.f32 %v777, %v858
    %v878 = vmul.f32 %v778, %v873
    %v879 = vld [vmem:[%s41] sm:$0xff]
    %v880 = vld [vmem:[%s41 + $0x8] sm:$0xff]
    %v881 = vld [vmem:[%s41 + $0x10] sm:$0xff]
    %v882 = vld [vmem:[%s41 + $0x18] sm:$0xff]
    %v883 = vld [vmem:[%s41 + $0x20] sm:$0xff]
    %v884 = vld [vmem:[%s41 + $0x28] sm:$0xff]
    %v885 = vld [vmem:[%s41 + $0x30] sm:$0xff]
    %v886 = vld [vmem:[%s41 + $0x38] sm:$0xff]
    %v887 = vld [vmem:[%s41 + $0x40] sm:$0xff]
    %v888 = vld [vmem:[%s41 + $0x48] sm:$0xff]
    %v889 = vld [vmem:[%s41 + $0x50] sm:$0xff]
    %v890 = vld [vmem:[%s41 + $0x58] sm:$0xff]
    %v891 = vld [vmem:[%s41 + $0x60] sm:$0xff]
    %v892 = vld [vmem:[%s41 + $0x68] sm:$0xff]
    %v893 = vld [vmem:[%s41 + $0x70] sm:$0xff]
    %v894 = vld [vmem:[%s41 + $0x78] sm:$0xff]
    %v895 = vld [vmem:[%s43] sm:$0x1]
    %v897 = vperm.slane %v895, 0
    %899 = vmatpush.msra.mxu0 %v894
    %900 = vmatpush.msra.mxu0 %v893
    %901 = vmatpush.msra.mxu0 %v892
    %902 = vmatpush.msra.mxu0 %v891
    %903 = vmatpush.msra.mxu0 %v890
    %904 = vmatpush.msra.mxu0 %v889
    %905 = vmatpush.msra.mxu0 %v888
    %906 = vmatpush.msra.mxu0 %v887
    %907 = vmatpush.msra.mxu0 %v886
    %908 = vmatpush.msra.mxu0 %v885
    %909 = vmatpush.msra.mxu0 %v884
    %910 = vmatpush.msra.mxu0 %v883
    %911 = vmatpush.msra.mxu0 %v882
    %912 = vmatpush.msra.mxu0 %v881
    %913 = vmatpush.msra.mxu0 %v880
    %914 = vmatpush.msra.mxu0 %v879
    %915 = vmatmul.f32.gmra.mxu0 %v874
    %v916 = vpop.f32.mrf.mxu0
    %v917 = vadd.f32 %v897, %v916
    %918 = vmatmul.f32.gmra.mxu0 %v875
    %v919 = vpop.f32.mrf.mxu0
    %v920 = vadd.f32 %v897, %v919
    %921 = vmatmul.f32.gmra.mxu0 %v876
    %v922 = vpop.f32.mrf.mxu0
    %v923 = vadd.f32 %v897, %v922
    %924 = vmatmul.f32.gmra.mxu0 %v877
    %v925 = vpop.f32.mrf.mxu0
    %v926 = vadd.f32 %v897, %v925
    %927 = vmatmul.f32.gmra.mxu0 %v878
    %v928 = vpop.f32.mrf.mxu0
    %v929 = vadd.f32 %v897, %v928
    %930 = vdwg.mxu0
    %v931 = vsub.f32 0.0, %v917
    %v932 = vsub.f32 0.0, %v920
    %v933 = vsub.f32 0.0, %v923
    %v934 = vsub.f32 0.0, %v926
    %v935 = vsub.f32 0.0, %v929
    %v936 = vmul.f32 %v931, 1.442695
    %v937 = vpow.pop %v936
    %v938 = vmul.f32 %v932, 1.442695
    %v939 = vpow.pop %v938
    %v940 = vmul.f32 %v933, 1.442695
    %v941 = vpow.pop %v940
    %v942 = vmul.f32 %v934, 1.442695
    %v943 = vpow.pop %v942
    %v944 = vmul.f32 %v935, 1.442695
    %v945 = vpow.pop %v944
    %v946 = vadd.f32 %v937, 1.0
    %v947 = vadd.f32 %v939, 1.0
    %v948 = vadd.f32 %v941, 1.0
    %v949 = vadd.f32 %v943, 1.0
    %v950 = vadd.f32 %v945, 1.0
    %v951 = vrcp.pop %v946
    %v952 = vmul.f32 %v946, %v951
    %v953 = vsub.f32 1.0, %v952
    %v954 = vmul.f32 %v951, %v953
    %v955 = vadd.f32 %v951, %v954
    %vm956 = vweird.f32 %v946
    %vm957 = vweird.f32 %v951
    %vm958 = vmor %vm956, %vm957
    %v959 = vsel %vm958, %v951, %v955
    %v960 = vand.u32 2147483647, %v946
    %vm961 = vcmp.eq.f32.partialorder %v960, 8.507059e+37
    %v962 = vand.u32 %v946, 2147483648
    %v963 = vor.u32 1.1754944e-38, %v962
    %v964 = vsel %vm961, %v963, %v959
    %v965 = vmul.f32 1.0, %v964
    %v966 = vrcp.pop %v947
    %v967 = vmul.f32 %v947, %v966
    %v968 = vsub.f32 1.0, %v967
    %v969 = vmul.f32 %v966, %v968
    %v970 = vadd.f32 %v966, %v969
    %vm971 = vweird.f32 %v947
    %vm972 = vweird.f32 %v966
    %vm973 = vmor %vm971, %vm972
    %v974 = vsel %vm973, %v966, %v970
    %v975 = vand.u32 2147483647, %v947
    %vm976 = vcmp.eq.f32.partialorder %v975, 8.507059e+37
    %v977 = vand.u32 %v947, 2147483648
    %v978 = vor.u32 1.1754944e-38, %v977
    %v979 = vsel %vm976, %v978, %v974
    %v980 = vmul.f32 1.0, %v979
    %v981 = vrcp.pop %v948
    %v982 = vmul.f32 %v948, %v981
    %v983 = vsub.f32 1.0, %v982
    %v984 = vmul.f32 %v981, %v983
    %v985 = vadd.f32 %v981, %v984
    %vm986 = vweird.f32 %v948
    %vm987 = vweird.f32 %v981
    %vm988 = vmor %vm986, %vm987
    %v989 = vsel %vm988, %v981, %v985
    %v990 = vand.u32 2147483647, %v948
    %vm991 = vcmp.eq.f32.partialorder %v990, 8.507059e+37
    %v992 = vand.u32 %v948, 2147483648
    %v993 = vor.u32 1.1754944e-38, %v992
    %v994 = vsel %vm991, %v993, %v989
    %v995 = vmul.f32 1.0, %v994
    %v996 = vrcp.pop %v949
    %v997 = vmul.f32 %v949, %v996
    %v998 = vsub.f32 1.0, %v997
    %v999 = vmul.f32 %v996, %v998
    %v1000 = vadd.f32 %v996, %v999
    %vm1001 = vweird.f32 %v949
    %vm1002 = vweird.f32 %v996
    %vm1003 = vmor %vm1001, %vm1002
    %v1004 = vsel %vm1003, %v996, %v1000
    %v1005 = vand.u32 2147483647, %v949
    %vm1006 = vcmp.eq.f32.partialorder %v1005, 8.507059e+37
    %v1007 = vand.u32 %v949, 2147483648
    %v1008 = vor.u32 1.1754944e-38, %v1007
    %v1009 = vsel %vm1006, %v1008, %v1004
    %v1010 = vmul.f32 1.0, %v1009
    %v1011 = vrcp.pop %v950
    %v1012 = vmul.f32 %v950, %v1011
    %v1013 = vsub.f32 1.0, %v1012
    %v1014 = vmul.f32 %v1011, %v1013
    %v1015 = vadd.f32 %v1011, %v1014
    %vm1016 = vweird.f32 %v950
    %vm1017 = vweird.f32 %v1011
    %vm1018 = vmor %vm1016, %vm1017
    %v1019 = vsel %vm1018, %v1011, %v1015
    %v1020 = vand.u32 2147483647, %v950
    %vm1021 = vcmp.eq.f32.partialorder %v1020, 8.507059e+37
    %v1022 = vand.u32 %v950, 2147483648
    %v1023 = vor.u32 1.1754944e-38, %v1022
    %v1024 = vsel %vm1021, %v1023, %v1019
    %v1025 = vmul.f32 1.0, %v1024
    %v1026 = vmul.f32 %v917, %v965
    %v1027 = vmul.f32 %v920, %v980
    %v1028 = vmul.f32 %v923, %v995
    %v1029 = vmul.f32 %v926, %v1010
    %v1030 = vmul.f32 %v929, %v1025
    %v1031 = vlaneseq
    %v1032 = vshrl.u32 %v1031, 7
    %v1033 = vadd.s32 %v1032, 8
    %v1034 = vld [vmem:[%s11] sm:$0x1]
    %v1035 = vperm.slane %v1034, 0
    %vm1036 = vcmp.eq.s32.totalorder %v1032, %v1035
    %vm1037 = vcmp.eq.s32.totalorder %v1033, %v1035
    %v1038 = vsel %vm1036, 1, 0
    %v1039 = vsel %vm1037, 1, 0
    %v1040 = vcvt.s32.f32 %v1038
    %v1041 = vcvt.s32.f32 %v1039
    %vm1042 = vcmask 326656
    %v1044 = vsel %vm1042, %v1040, 0
    %v1047 = vsel %vm1042, %v1041, 0
    %1049 = vmatpush.msra.mxu0 0.0
    %1050 = vmatpush.msra.mxu0 0.0
    %1051 = vmatpush.msra.mxu0 0.0
    %1052 = vmatpush.msra.mxu0 0.0
    %1053 = vmatpush.msra.mxu0 0.0
    %1054 = vmatpush.msra.mxu0 0.0
    %1055 = vmatpush.msra.mxu0 0.0
    %1056 = vmatpush.msra.mxu0 0.0
    %1057 = vmatpush.msra.mxu0 0.0
    %1058 = vmatpush.msra.mxu0 0.0
    %1059 = vmatpush.msra.mxu0 0.0
    %1060 = vmatpush.msra.mxu0 %v1030
    %1061 = vmatpush.msra.mxu0 %v1029
    %1062 = vmatpush.msra.mxu0 %v1028
    %1063 = vmatpush.msra.mxu0 %v1027
    %1064 = vmatpush.msra.mxu0 %v1026
    %1065 = vmatmul.f32.gmra.mxu0 %v1044
    %v1066 = vpop.f32.mrf.mxu0
    %v1067 = vadd.f32 0.0, %v1066
    %1068 = vmatmul.f32.gmra.mxu0 %v1047
    %v1069 = vpop.f32.mrf.mxu0
    %v1070 = vadd.f32 0.0, %v1069
    %1071 = vdwg.mxu0
    %v1072 = vld [vmem:[%s45] sm:$0xff]
    %v1073 = vld [vmem:[%s45 + $0x8] sm:$0xff]
    %v1074 = vld [vmem:[%s45 + $0x10] sm:$0xff]
    %v1075 = vld [vmem:[%s45 + $0x18] sm:$0xff]
    %v1076 = vld [vmem:[%s45 + $0x20] sm:$0xff]
    %v1077 = vld [vmem:[%s45 + $0x28] sm:$0xff]
    %v1078 = vld [vmem:[%s45 + $0x30] sm:$0xff]
    %v1079 = vld [vmem:[%s45 + $0x38] sm:$0xff]
    %v1080 = vld [vmem:[%s45 + $0x40] sm:$0xff]
    %v1081 = vld [vmem:[%s45 + $0x48] sm:$0xff]
    %v1082 = vld [vmem:[%s45 + $0x50] sm:$0xff]
    %v1083 = vld [vmem:[%s45 + $0x58] sm:$0xff]
    %v1084 = vld [vmem:[%s45 + $0x60] sm:$0xff]
    %v1085 = vld [vmem:[%s45 + $0x68] sm:$0xff]
    %v1086 = vld [vmem:[%s45 + $0x70] sm:$0xff]
    %v1087 = vld [vmem:[%s45 + $0x78] sm:$0xff]
    %v1088 = vld [vmem:[%s47] sm:$0xff]
    %v1089 = vld [vmem:[%s47 + $0x8] sm:$0xff]
    %v1090 = vld [vmem:[%s47 + $0x10] sm:$0xff]
    %v1091 = vld [vmem:[%s47 + $0x18] sm:$0xff]
    %v1092 = vld [vmem:[%s47 + $0x20] sm:$0xff]
    %v1093 = vld [vmem:[%s47 + $0x28] sm:$0xff]
    %v1094 = vld [vmem:[%s47 + $0x30] sm:$0xff]
    %v1095 = vld [vmem:[%s47 + $0x38] sm:$0xff]
    %v1096 = vld [vmem:[%s47 + $0x40] sm:$0xff]
    %v1097 = vld [vmem:[%s47 + $0x48] sm:$0xff]
    %v1098 = vld [vmem:[%s47 + $0x50] sm:$0xff]
    %v1099 = vld [vmem:[%s47 + $0x58] sm:$0xff]
    %v1100 = vld [vmem:[%s47 + $0x60] sm:$0xff]
    %v1101 = vld [vmem:[%s47 + $0x68] sm:$0xff]
    %v1102 = vld [vmem:[%s47 + $0x70] sm:$0xff]
    %v1103 = vld [vmem:[%s47 + $0x78] sm:$0xff]
    %1104 = vmatpush.msra.mxu0 %v1103
    %1105 = vmatpush.msra.mxu0 %v1102
    %1106 = vmatpush.msra.mxu0 %v1101
    %1107 = vmatpush.msra.mxu0 %v1100
    %1108 = vmatpush.msra.mxu0 %v1099
    %1109 = vmatpush.msra.mxu0 %v1098
    %1110 = vmatpush.msra.mxu0 %v1097
    %1111 = vmatpush.msra.mxu0 %v1096
    %1112 = vmatpush.msra.mxu0 %v1095
    %1113 = vmatpush.msra.mxu0 %v1094
    %1114 = vmatpush.msra.mxu0 %v1093
    %1115 = vmatpush.msra.mxu0 %v1092
    %1116 = vmatpush.msra.mxu0 %v1091
    %1117 = vmatpush.msra.mxu0 %v1090
    %1118 = vmatpush.msra.mxu0 %v1089
    %1119 = vmatpush.msra.mxu0 %v1088
    %1120 = vmatmul.f32.gmra.mxu0 %v1067
    %v1121 = vpop.f32.mrf.mxu0
    %v1122 = vadd.f32 0.0, %v1121
    %1123 = vmatmul.f32.gmra.mxu0 %v1070
    %v1124 = vpop.f32.mrf.mxu0
    %v1125 = vadd.f32 0.0, %v1124
    %1126 = vdwg.mxu0
    %1127 = vmatpush.msra.mxu0 %v1087
    %1128 = vmatpush.msra.mxu0 %v1086
    %1129 = vmatpush.msra.mxu0 %v1085
    %1130 = vmatpush.msra.mxu0 %v1084
    %1131 = vmatpush.msra.mxu0 %v1083
    %1132 = vmatpush.msra.mxu0 %v1082
    %1133 = vmatpush.msra.mxu0 %v1081
    %1134 = vmatpush.msra.mxu0 %v1080
    %1135 = vmatpush.msra.mxu0 %v1079
    %1136 = vmatpush.msra.mxu0 %v1078
    %1137 = vmatpush.msra.mxu0 %v1077
    %1138 = vmatpush.msra.mxu0 %v1076
    %1139 = vmatpush.msra.mxu0 %v1075
    %1140 = vmatpush.msra.mxu0 %v1074
    %1141 = vmatpush.msra.mxu0 %v1073
    %1142 = vmatpush.msra.mxu0 %v1072
    %1143 = vmatmul.f32.gmra.mxu0 %v381
    %v1144 = vpop.f32.mrf.mxu0
    %v1145 = vadd.f32 %v1122, %v1144
    %1146 = vmatmul.f32.gmra.mxu0 %v382
    %v1147 = vpop.f32.mrf.mxu0
    %v1148 = vadd.f32 %v1125, %v1147
    %1149 = vdwg.mxu0
    %v1150 = vld [vmem:[%s49] sm:$0x1]
    %v1152 = vperm.slane %v1150, 0
    %v1154 = vadd.f32 %v1145, %v1152
    %v1155 = vadd.f32 %v1148, %v1152
    %v1156 = vsub.f32 0.0, %v1154
    %v1157 = vsub.f32 0.0, %v1155
    %v1158 = vmul.f32 %v1156, 1.442695
    %v1159 = vpow.pop %v1158
    %v1160 = vmul.f32 %v1157, 1.442695
    %v1161 = vpow.pop %v1160
    %v1162 = vadd.f32 %v1159, 1.0
    %v1163 = vadd.f32 %v1161, 1.0
    %v1164 = vrcp.pop %v1162
    %v1165 = vmul.f32 %v1162, %v1164
    %v1166 = vsub.f32 1.0, %v1165
    %v1167 = vmul.f32 %v1164, %v1166
    %v1168 = vadd.f32 %v1164, %v1167
    %vm1169 = vweird.f32 %v1162
    %vm1170 = vweird.f32 %v1164
    %vm1171 = vmor %vm1169, %vm1170
    %v1172 = vsel %vm1171, %v1164, %v1168
    %v1173 = vand.u32 2147483647, %v1162
    %vm1174 = vcmp.eq.f32.partialorder %v1173, 8.507059e+37
    %v1175 = vand.u32 %v1162, 2147483648
    %v1176 = vor.u32 1.1754944e-38, %v1175
    %v1177 = vsel %vm1174, %v1176, %v1172
    %v1178 = vmul.f32 1.0, %v1177
    %v1179 = vrcp.pop %v1163
    %v1180 = vmul.f32 %v1163, %v1179
    %v1181 = vsub.f32 1.0, %v1180
    %v1182 = vmul.f32 %v1179, %v1181
    %v1183 = vadd.f32 %v1179, %v1182
    %vm1184 = vweird.f32 %v1163
    %vm1185 = vweird.f32 %v1179
    %vm1186 = vmor %vm1184, %vm1185
    %v1187 = vsel %vm1186, %v1179, %v1183
    %v1188 = vand.u32 2147483647, %v1163
    %vm1189 = vcmp.eq.f32.partialorder %v1188, 8.507059e+37
    %v1190 = vand.u32 %v1163, 2147483648
    %v1191 = vor.u32 1.1754944e-38, %v1190
    %v1192 = vsel %vm1189, %v1191, %v1187
    %v1193 = vmul.f32 1.0, %v1192
    %v1194 = vmul.f32 %v1154, %v1178
    %v1195 = vmul.f32 %v1155, %v1193
    %v1196 = vld [vmem:[%s51] sm:$0xff]
    %v1197 = vld [vmem:[%s51 + $0x8] sm:$0xff]
    %v1198 = vld [vmem:[%s51 + $0x10] sm:$0xff]
    %v1199 = vld [vmem:[%s51 + $0x18] sm:$0xff]
    %v1200 = vld [vmem:[%s51 + $0x20] sm:$0xff]
    %v1201 = vld [vmem:[%s51 + $0x28] sm:$0xff]
    %v1202 = vld [vmem:[%s51 + $0x30] sm:$0xff]
    %v1203 = vld [vmem:[%s51 + $0x38] sm:$0xff]
    %v1204 = vld [vmem:[%s51 + $0x40] sm:$0xff]
    %v1205 = vld [vmem:[%s51 + $0x48] sm:$0xff]
    %v1206 = vld [vmem:[%s51 + $0x50] sm:$0xff]
    %v1207 = vld [vmem:[%s51 + $0x58] sm:$0xff]
    %v1208 = vld [vmem:[%s51 + $0x60] sm:$0xff]
    %v1209 = vld [vmem:[%s51 + $0x68] sm:$0xff]
    %v1210 = vld [vmem:[%s51 + $0x70] sm:$0xff]
    %v1211 = vld [vmem:[%s51 + $0x78] sm:$0xff]
    %v1212 = vld [vmem:[%s53] sm:$0x1]
    %v1214 = vperm.slane %v1212, 0
    %1216 = vmatpush.msra.mxu0 %v1211
    %1217 = vmatpush.msra.mxu0 %v1210
    %1218 = vmatpush.msra.mxu0 %v1209
    %1219 = vmatpush.msra.mxu0 %v1208
    %1220 = vmatpush.msra.mxu0 %v1207
    %1221 = vmatpush.msra.mxu0 %v1206
    %1222 = vmatpush.msra.mxu0 %v1205
    %1223 = vmatpush.msra.mxu0 %v1204
    %1224 = vmatpush.msra.mxu0 %v1203
    %1225 = vmatpush.msra.mxu0 %v1202
    %1226 = vmatpush.msra.mxu0 %v1201
    %1227 = vmatpush.msra.mxu0 %v1200
    %1228 = vmatpush.msra.mxu0 %v1199
    %1229 = vmatpush.msra.mxu0 %v1198
    %1230 = vmatpush.msra.mxu0 %v1197
    %1231 = vmatpush.msra.mxu0 %v1196
    %1232 = vmatmul.f32.gmra.mxu0 %v1194
    %v1233 = vpop.f32.mrf.mxu0
    %v1234 = vadd.f32 %v1214, %v1233
    %1235 = vmatmul.f32.gmra.mxu0 %v1195
    %v1236 = vpop.f32.mrf.mxu0
    %v1237 = vadd.f32 %v1214, %v1236
    %1238 = vdwg.mxu0
    %v1239 = vld [vmem:[%s55] sm:$0xff]
    %v1240 = vld [vmem:[%s55 + $0x8] sm:$0xff]
    %v1241 = vld [vmem:[%s55 + $0x10] sm:$0xff]
    %v1242 = vld [vmem:[%s55 + $0x18] sm:$0xff]
    %v1243 = vld [vmem:[%s55 + $0x20] sm:$0xff]
    %v1244 = vld [vmem:[%s55 + $0x28] sm:$0xff]
    %v1245 = vld [vmem:[%s55 + $0x30] sm:$0xff]
    %v1246 = vld [vmem:[%s55 + $0x38] sm:$0xff]
    %v1247 = vld [vmem:[%s55 + $0x40] sm:$0xff]
    %v1248 = vld [vmem:[%s55 + $0x48] sm:$0xff]
    %v1249 = vld [vmem:[%s55 + $0x50] sm:$0xff]
    %v1250 = vld [vmem:[%s55 + $0x58] sm:$0xff]
    %v1251 = vld [vmem:[%s55 + $0x60] sm:$0xff]
    %v1252 = vld [vmem:[%s55 + $0x68] sm:$0xff]
    %v1253 = vld [vmem:[%s55 + $0x70] sm:$0xff]
    %v1254 = vld [vmem:[%s55 + $0x78] sm:$0xff]
    %v1255 = vld [vmem:[%s55 + $0x80] sm:$0xff]
    %v1256 = vld [vmem:[%s55 + $0x88] sm:$0xff]
    %v1257 = vld [vmem:[%s55 + $0x90] sm:$0xff]
    %v1258 = vld [vmem:[%s55 + $0x98] sm:$0xff]
    %v1259 = vld [vmem:[%s55 + $0xa0] sm:$0xff]
    %v1260 = vld [vmem:[%s55 + $0xa8] sm:$0xff]
    %v1261 = vld [vmem:[%s55 + $0xb0] sm:$0xff]
    %v1262 = vld [vmem:[%s55 + $0xb8] sm:$0xff]
    %v1263 = vld [vmem:[%s55 + $0xc0] sm:$0xff]
    %v1264 = vld [vmem:[%s55 + $0xc8] sm:$0xff]
    %v1265 = vld [vmem:[%s55 + $0xd0] sm:$0xff]
    %v1266 = vld [vmem:[%s55 + $0xd8] sm:$0xff]
    %v1267 = vld [vmem:[%s55 + $0xe0] sm:$0xff]
    %v1268 = vld [vmem:[%s55 + $0xe8] sm:$0xff]
    %v1269 = vld [vmem:[%s55 + $0xf0] sm:$0xff]
    %v1270 = vld [vmem:[%s55 + $0xf8] sm:$0xff]
    %v1271 = vld [vmem:[%s57] sm:$0x3]
    %v1273 = vperm.slane %v1271, 0
    %v1274 = vperm.slane %v1271, 1
    %1277 = vmatpush.msra.mxu0 %v1269
    %1278 = vmatpush.msra.mxu0 %v1267
    %1279 = vmatpush.msra.mxu0 %v1265
    %1280 = vmatpush.msra.mxu0 %v1263
    %1281 = vmatpush.msra.mxu0 %v1261
    %1282 = vmatpush.msra.mxu0 %v1259
    %1283 = vmatpush.msra.mxu0 %v1257
    %1284 = vmatpush.msra.mxu0 %v1255
    %1285 = vmatpush.msra.mxu0 %v1253
    %1286 = vmatpush.msra.mxu0 %v1251
    %1287 = vmatpush.msra.mxu0 %v1249
    %1288 = vmatpush.msra.mxu0 %v1247
    %1289 = vmatpush.msra.mxu0 %v1245
    %1290 = vmatpush.msra.mxu0 %v1243
    %1291 = vmatpush.msra.mxu0 %v1241
    %1292 = vmatpush.msra.mxu0 %v1239
    %1293 = vmatmul.f32.gmra.mxu0 %v1234
    %v1294 = vpop.f32.mrf.mxu0
    %v1295 = vadd.f32 %v1273, %v1294
    %1296 = vmatmul.f32.gmra.mxu0 %v1237
    %v1297 = vpop.f32.mrf.mxu0
    %v1298 = vadd.f32 %v1273, %v1297
    %1299 = vdwg.mxu0
    %1300 = vmatpush.msra.mxu0 %v1270
    %1301 = vmatpush.msra.mxu0 %v1268
    %1302 = vmatpush.msra.mxu0 %v1266
    %1303 = vmatpush.msra.mxu0 %v1264
    %1304 = vmatpush.msra.mxu0 %v1262
    %1305 = vmatpush.msra.mxu0 %v1260
    %1306 = vmatpush.msra.mxu0 %v1258
    %1307 = vmatpush.msra.mxu0 %v1256
    %1308 = vmatpush.msra.mxu0 %v1254
    %1309 = vmatpush.msra.mxu0 %v1252
    %1310 = vmatpush.msra.mxu0 %v1250
    %1311 = vmatpush.msra.mxu0 %v1248
    %1312 = vmatpush.msra.mxu0 %v1246
    %1313 = vmatpush.msra.mxu0 %v1244
    %1314 = vmatpush.msra.mxu0 %v1242
    %1315 = vmatpush.msra.mxu0 %v1240
    %1316 = vmatmul.f32.gmra.mxu0 %v1234
    %v1317 = vpop.f32.mrf.mxu0
    %v1318 = vadd.f32 %v1274, %v1317
    %1319 = vmatmul.f32.gmra.mxu0 %v1237
    %v1320 = vpop.f32.mrf.mxu0
    %v1321 = vadd.f32 %v1274, %v1320
    %1322 = vdwg.mxu0
    %v1323 = vld [vmem:[%s7] sm:$0xff]
    %v1324 = vld [vmem:[%s7 + $0x8] sm:$0xff]
    %v1325 = vmul.f32 %v1318, 1.442695
    %v1326 = vpow.pop %v1325
    %v1327 = vmul.f32 %v1321, 1.442695
    %v1328 = vpow.pop %v1327
    %v1329 = vmul.f32 %v1323, %v1326
    %v1330 = vmul.f32 %v1324, %v1328
    %v1331 = vadd.f32 %v1329, %v1295
    %v1332 = vadd.f32 %v1330, %v1298
    %1333 = vst [vmem:[#allocation2] sm:$0xff] %v1331
    %1334 = vst [vmem:[#allocation2 + $0x8] sm:$0xff] %v1332
    %1335 = vst [vmem:[#allocation4] sm:$0xff] %v1295
    %1336 = vst [vmem:[#allocation4 + $0x8] sm:$0xff] %v1298
    %1337 = vst [vmem:[#allocation6] sm:$0xff] %v1318
    %1338 = vst [vmem:[#allocation6 + $0x8] sm:$0xff] %v1321
    %v1339 = vld [vmem:[%s13] sm:$0xff]
    %v1340 = vld [vmem:[%s13 + $0x8] sm:$0xff]
    %v1341 = vld [vmem:[%s13 + $0x10] sm:$0xff]
    %v1342 = vld [vmem:[%s13 + $0x18] sm:$0xff]
    %v1343 = vld [vmem:[%s13 + $0x20] sm:$0xff]
    %v1344 = vld [vmem:[%s13 + $0x28] sm:$0xff]
    %v1345 = vld [vmem:[%s13 + $0x30] sm:$0xff]
    %v1346 = vld [vmem:[%s13 + $0x38] sm:$0xff]
    %v1347 = vld [vmem:[%s13 + $0x40] sm:$0xff]
    %v1348 = vld [vmem:[%s13 + $0x48] sm:$0xff]
    %v1349 = vld [vmem:[%s13 + $0x50] sm:$0xff]
    %v1350 = vld [vmem:[%s13 + $0x58] sm:$0xff]
    %v1351 = vld [vmem:[%s13 + $0x60] sm:$0xff]
    %v1352 = vld [vmem:[%s13 + $0x68] sm:$0xff]
    %v1353 = vld [vmem:[%s13 + $0x70] sm:$0xff]
    %v1354 = vld [vmem:[%s13 + $0x78] sm:$0xff]
    %v1355 = vld [vmem:[%s13 + $0x80] sm:$0xff]
    %v1356 = vld [vmem:[%s13 + $0x88] sm:$0xff]
    %v1357 = vld [vmem:[%s13 + $0x90] sm:$0xff]
    %v1358 = vld [vmem:[%s13 + $0x98] sm:$0xff]
    %1359 = vset.pattern.permute.xlu0 0
    %1360 = vperm.xlu0 %1359, %v1339
    %v1361 = vpop.permute.xlu0 %1360
    %1362 = vset.pattern.permute.xlu0 0
    %1363 = vperm.xlu0 %1362, %v1340
    %v1364 = vpop.permute.xlu0 %1363
    %1365 = vset.pattern.permute.xlu0 0
    %1366 = vperm.xlu0 %1365, %v1341
    %v1367 = vpop.permute.xlu0 %1366
    %1368 = vset.pattern.permute.xlu0 0
    %1369 = vperm.xlu0 %1368, %v1342
    %v1370 = vpop.permute.xlu0 %1369
    %1371 = vset.pattern.permute.xlu0 0
    %1372 = vperm.xlu0 %1371, %v1343
    %v1373 = vpop.permute.xlu0 %1372
    %1374 = vset.pattern.permute.xlu0 0
    %1375 = vperm.xlu0 %1374, %v1344
    %v1376 = vpop.permute.xlu0 %1375
    %1377 = vset.pattern.permute.xlu0 0
    %1378 = vperm.xlu0 %1377, %v1345
    %v1379 = vpop.permute.xlu0 %1378
    %1380 = vset.pattern.permute.xlu0 0
    %1381 = vperm.xlu0 %1380, %v1346
    %v1382 = vpop.permute.xlu0 %1381
    %1383 = vset.pattern.permute.xlu0 0
    %1384 = vperm.xlu0 %1383, %v1347
    %v1385 = vpop.permute.xlu0 %1384
    %1386 = vset.pattern.permute.xlu0 0
    %1387 = vperm.xlu0 %1386, %v1348
    %v1388 = vpop.permute.xlu0 %1387
    %1389 = vset.pattern.permute.xlu0 0
    %1390 = vperm.xlu0 %1389, %v1349
    %v1391 = vpop.permute.xlu0 %1390
    %1392 = vset.pattern.permute.xlu0 0
    %1393 = vperm.xlu0 %1392, %v1350
    %v1394 = vpop.permute.xlu0 %1393
    %1395 = vset.pattern.permute.xlu0 0
    %1396 = vperm.xlu0 %1395, %v1351
    %v1397 = vpop.permute.xlu0 %1396
    %1398 = vset.pattern.permute.xlu0 0
    %1399 = vperm.xlu0 %1398, %v1352
    %v1400 = vpop.permute.xlu0 %1399
    %1401 = vset.pattern.permute.xlu0 0
    %1402 = vperm.xlu0 %1401, %v1353
    %v1403 = vpop.permute.xlu0 %1402
    %1404 = vset.pattern.permute.xlu0 0
    %1405 = vperm.xlu0 %1404, %v1354
    %v1406 = vpop.permute.xlu0 %1405
    %1407 = vset.pattern.permute.xlu0 0
    %1408 = vperm.xlu0 %1407, %v1355
    %v1409 = vpop.permute.xlu0 %1408
    %1410 = vset.pattern.permute.xlu0 0
    %1411 = vperm.xlu0 %1410, %v1356
    %v1412 = vpop.permute.xlu0 %1411
    %1413 = vset.pattern.permute.xlu0 0
    %1414 = vperm.xlu0 %1413, %v1357
    %v1415 = vpop.permute.xlu0 %1414
    %1416 = vset.pattern.permute.xlu0 0
    %1417 = vperm.xlu0 %1416, %v1358
    %v1418 = vpop.permute.xlu0 %1417
    %vm1419 = vcmp.eq.s32.totalorder %v394, %v1361
    %vm1420 = vcmp.eq.s32.totalorder %v394, %v1364
    %vm1421 = vcmp.eq.s32.totalorder %v394, %v1367
    %vm1422 = vcmp.eq.s32.totalorder %v394, %v1370
    %vm1423 = vcmp.eq.s32.totalorder %v394, %v1373
    %vm1424 = vcmp.eq.s32.totalorder %v394, %v1376
    %vm1425 = vcmp.eq.s32.totalorder %v394, %v1379
    %vm1426 = vcmp.eq.s32.totalorder %v394, %v1382
    %vm1427 = vcmp.eq.s32.totalorder %v394, %v1385
    %vm1428 = vcmp.eq.s32.totalorder %v394, %v1388
    %vm1429 = vcmp.eq.s32.totalorder %v394, %v1391
    %vm1430 = vcmp.eq.s32.totalorder %v394, %v1394
    %vm1431 = vcmp.eq.s32.totalorder %v394, %v1397
    %vm1432 = vcmp.eq.s32.totalorder %v394, %v1400
    %vm1433 = vcmp.eq.s32.totalorder %v394, %v1403
    %vm1434 = vcmp.eq.s32.totalorder %v394, %v1406
    %vm1435 = vcmp.eq.s32.totalorder %v394, %v1409
    %vm1436 = vcmp.eq.s32.totalorder %v394, %v1412
    %vm1437 = vcmp.eq.s32.totalorder %v394, %v1415
    %vm1438 = vcmp.eq.s32.totalorder %v394, %v1418
    %v1439 = vsel %vm1419, 1, 0
    %v1440 = vsel %vm1420, 1, 0
    %v1441 = vsel %vm1421, 1, 0
    %v1442 = vsel %vm1422, 1, 0
    %v1443 = vsel %vm1423, 1, 0
    %v1444 = vsel %vm1424, 1, 0
    %v1445 = vsel %vm1425, 1, 0
    %v1446 = vsel %vm1426, 1, 0
    %v1447 = vsel %vm1427, 1, 0
    %v1448 = vsel %vm1428, 1, 0
    %v1449 = vsel %vm1429, 1, 0
    %v1450 = vsel %vm1430, 1, 0
    %v1451 = vsel %vm1431, 1, 0
    %v1452 = vsel %vm1432, 1, 0
    %v1453 = vsel %vm1433, 1, 0
    %v1454 = vsel %vm1434, 1, 0
    %v1455 = vsel %vm1435, 1, 0
    %v1456 = vsel %vm1436, 1, 0
    %v1457 = vsel %vm1437, 1, 0
    %v1458 = vsel %vm1438, 1, 0
    %v1459 = vcvt.s32.f32 %v1439
    %v1460 = vcvt.s32.f32 %v1440
    %v1461 = vcvt.s32.f32 %v1441
    %v1462 = vcvt.s32.f32 %v1442
    %v1463 = vcvt.s32.f32 %v1443
    %v1464 = vcvt.s32.f32 %v1444
    %v1465 = vcvt.s32.f32 %v1445
    %v1466 = vcvt.s32.f32 %v1446
    %v1467 = vcvt.s32.f32 %v1447
    %v1468 = vcvt.s32.f32 %v1448
    %v1469 = vcvt.s32.f32 %v1449
    %v1470 = vcvt.s32.f32 %v1450
    %v1471 = vcvt.s32.f32 %v1451
    %v1472 = vcvt.s32.f32 %v1452
    %v1473 = vcvt.s32.f32 %v1453
    %v1474 = vcvt.s32.f32 %v1454
    %v1475 = vcvt.s32.f32 %v1455
    %v1476 = vcvt.s32.f32 %v1456
    %v1477 = vcvt.s32.f32 %v1457
    %v1478 = vcvt.s32.f32 %v1458
    %v1480 = vsel %vm455, %v1459, 0
    %v1483 = vsel %vm455, %v1460, 0
    %v1486 = vsel %vm455, %v1461, 0
    %v1489 = vsel %vm455, %v1462, 0
    %v1492 = vsel %vm455, %v1463, 0
    %v1495 = vsel %vm455, %v1464, 0
    %v1498 = vsel %vm455, %v1465, 0
    %v1501 = vsel %vm455, %v1466, 0
    %v1504 = vsel %vm455, %v1467, 0
    %v1507 = vsel %vm455, %v1468, 0
    %v1510 = vsel %vm455, %v1469, 0
    %v1513 = vsel %vm455, %v1470, 0
    %v1516 = vsel %vm455, %v1471, 0
    %v1519 = vsel %vm455, %v1472, 0
    %v1522 = vsel %vm455, %v1473, 0
    %v1525 = vsel %vm455, %v1474, 0
    %v1528 = vsel %vm455, %v1475, 0
    %v1531 = vsel %vm455, %v1476, 0
    %v1534 = vsel %vm455, %v1477, 0
    %v1537 = vsel %vm455, %v1478, 0
    %1539 = vmatpush.msra.mxu0 0.0
    %1540 = vmatpush.msra.mxu0 0.0
    %1541 = vmatpush.msra.mxu0 0.0
    %1542 = vmatpush.msra.mxu0 0.0
    %1543 = vmatpush.msra.mxu0 0.0
    %1544 = vmatpush.msra.mxu0 0.0
    %1545 = vmatpush.msra.mxu0 0.0
    %1546 = vmatpush.msra.mxu0 0.0
    %1547 = vmatpush.msra.mxu0 0.0
    %1548 = vmatpush.msra.mxu0 0.0
    %1549 = vmatpush.msra.mxu0 0.0
    %1550 = vmatpush.msra.mxu0 0.0
    %1551 = vmatpush.msra.mxu0 0.0
    %1552 = vmatpush.msra.mxu0 0.0
    %1553 = vmatpush.msra.mxu0 %v1332
    %1554 = vmatpush.msra.mxu0 %v1331
    %1555 = vmatmul.f32.gmra.mxu0 %v1480
    %v1556 = vpop.f32.mrf.mxu0
    %v1557 = vadd.f32 0.0, %v1556
    %1558 = vmatmul.f32.gmra.mxu0 %v1483
    %v1559 = vpop.f32.mrf.mxu0
    %v1560 = vadd.f32 0.0, %v1559
    %1561 = vmatmul.f32.gmra.mxu0 %v1486
    %v1562 = vpop.f32.mrf.mxu0
    %v1563 = vadd.f32 0.0, %v1562
    %1564 = vmatmul.f32.gmra.mxu0 %v1489
    %v1565 = vpop.f32.mrf.mxu0
    %v1566 = vadd.f32 0.0, %v1565
    %1567 = vmatmul.f32.gmra.mxu0 %v1492
    %v1568 = vpop.f32.mrf.mxu0
    %v1569 = vadd.f32 0.0, %v1568
    %1570 = vmatmul.f32.gmra.mxu0 %v1495
    %v1571 = vpop.f32.mrf.mxu0
    %v1572 = vadd.f32 0.0, %v1571
    %1573 = vmatmul.f32.gmra.mxu0 %v1498
    %v1574 = vpop.f32.mrf.mxu0
    %v1575 = vadd.f32 0.0, %v1574
    %1576 = vmatmul.f32.gmra.mxu0 %v1501
    %v1577 = vpop.f32.mrf.mxu0
    %v1578 = vadd.f32 0.0, %v1577
    %1579 = vmatmul.f32.gmra.mxu0 %v1504
    %v1580 = vpop.f32.mrf.mxu0
    %v1581 = vadd.f32 0.0, %v1580
    %1582 = vmatmul.f32.gmra.mxu0 %v1507
    %v1583 = vpop.f32.mrf.mxu0
    %v1584 = vadd.f32 0.0, %v1583
    %1585 = vmatmul.f32.gmra.mxu0 %v1510
    %v1586 = vpop.f32.mrf.mxu0
    %v1587 = vadd.f32 0.0, %v1586
    %1588 = vmatmul.f32.gmra.mxu0 %v1513
    %v1589 = vpop.f32.mrf.mxu0
    %v1590 = vadd.f32 0.0, %v1589
    %1591 = vmatmul.f32.gmra.mxu0 %v1516
    %v1592 = vpop.f32.mrf.mxu0
    %v1593 = vadd.f32 0.0, %v1592
    %1594 = vmatmul.f32.gmra.mxu0 %v1519
    %v1595 = vpop.f32.mrf.mxu0
    %v1596 = vadd.f32 0.0, %v1595
    %1597 = vmatmul.f32.gmra.mxu0 %v1522
    %v1598 = vpop.f32.mrf.mxu0
    %v1599 = vadd.f32 0.0, %v1598
    %1600 = vmatmul.f32.gmra.mxu0 %v1525
    %v1601 = vpop.f32.mrf.mxu0
    %v1602 = vadd.f32 0.0, %v1601
    %1603 = vmatmul.f32.gmra.mxu0 %v1528
    %v1604 = vpop.f32.mrf.mxu0
    %v1605 = vadd.f32 0.0, %v1604
    %1606 = vmatmul.f32.gmra.mxu0 %v1531
    %v1607 = vpop.f32.mrf.mxu0
    %v1608 = vadd.f32 0.0, %v1607
    %1609 = vmatmul.f32.gmra.mxu0 %v1534
    %v1610 = vpop.f32.mrf.mxu0
    %v1611 = vadd.f32 0.0, %v1610
    %1612 = vmatmul.f32.gmra.mxu0 %v1537
    %v1613 = vpop.f32.mrf.mxu0
    %v1614 = vadd.f32 0.0, %v1613
    %1615 = vdwg.mxu0
    %v1616 = vmul.f32 %v1557, %v1587
    %v1617 = vmul.f32 %v1560, %v1590
    %v1618 = vmul.f32 %v1563, %v1593
    %v1619 = vmul.f32 %v1566, %v1596
    %v1620 = vmul.f32 %v1569, %v1599
    %v1621 = vmul.f32 %v1572, %v1602
    %v1622 = vmul.f32 %v1575, %v1605
    %v1623 = vmul.f32 %v1578, %v1608
    %v1624 = vmul.f32 %v1581, %v1611
    %v1625 = vmul.f32 %v1584, %v1614
    %v1626 = vld [vmem:[%s59] sm:$0xff]
    %v1627 = vld [vmem:[%s59 + $0x8] sm:$0xff]
    %v1628 = vld [vmem:[%s59 + $0x10] sm:$0xff]
    %v1629 = vld [vmem:[%s59 + $0x18] sm:$0xff]
    %v1630 = vld [vmem:[%s59 + $0x20] sm:$0xff]
    %v1631 = vld [vmem:[%s59 + $0x28] sm:$0xff]
    %v1632 = vld [vmem:[%s59 + $0x30] sm:$0xff]
    %v1633 = vld [vmem:[%s59 + $0x38] sm:$0xff]
    %v1634 = vld [vmem:[%s59 + $0x40] sm:$0xff]
    %v1635 = vld [vmem:[%s59 + $0x48] sm:$0xff]
    %v1636 = vld [vmem:[%s59 + $0x50] sm:$0xff]
    %v1637 = vld [vmem:[%s59 + $0x58] sm:$0xff]
    %v1638 = vld [vmem:[%s59 + $0x60] sm:$0xff]
    %v1639 = vld [vmem:[%s59 + $0x68] sm:$0xff]
    %v1640 = vld [vmem:[%s59 + $0x70] sm:$0xff]
    %v1641 = vld [vmem:[%s59 + $0x78] sm:$0xff]
    %v1642 = vld [vmem:[%s61] sm:$0x1]
    %v1644 = vperm.slane %v1642, 0
    %1646 = vmatpush.msra.mxu0 %v1641
    %1647 = vmatpush.msra.mxu0 %v1640
    %1648 = vmatpush.msra.mxu0 %v1639
    %1649 = vmatpush.msra.mxu0 %v1638
    %1650 = vmatpush.msra.mxu0 %v1637
    %1651 = vmatpush.msra.mxu0 %v1636
    %1652 = vmatpush.msra.mxu0 %v1635
    %1653 = vmatpush.msra.mxu0 %v1634
    %1654 = vmatpush.msra.mxu0 %v1633
    %1655 = vmatpush.msra.mxu0 %v1632
    %1656 = vmatpush.msra.mxu0 %v1631
    %1657 = vmatpush.msra.mxu0 %v1630
    %1658 = vmatpush.msra.mxu0 %v1629
    %1659 = vmatpush.msra.mxu0 %v1628
    %1660 = vmatpush.msra.mxu0 %v1627
    %1661 = vmatpush.msra.mxu0 %v1626
    %1662 = vmatmul.f32.gmra.mxu0 %v1616
    %v1663 = vpop.f32.mrf.mxu0
    %v1664 = vadd.f32 %v1644, %v1663
    %1665 = vmatmul.f32.gmra.mxu0 %v1617
    %v1666 = vpop.f32.mrf.mxu0
    %v1667 = vadd.f32 %v1644, %v1666
    %1668 = vmatmul.f32.gmra.mxu0 %v1618
    %v1669 = vpop.f32.mrf.mxu0
    %v1670 = vadd.f32 %v1644, %v1669
    %1671 = vmatmul.f32.gmra.mxu0 %v1619
    %v1672 = vpop.f32.mrf.mxu0
    %v1673 = vadd.f32 %v1644, %v1672
    %1674 = vmatmul.f32.gmra.mxu0 %v1620
    %v1675 = vpop.f32.mrf.mxu0
    %v1676 = vadd.f32 %v1644, %v1675
    %1677 = vmatmul.f32.gmra.mxu0 %v1621
    %v1678 = vpop.f32.mrf.mxu0
    %v1679 = vadd.f32 %v1644, %v1678
    %1680 = vmatmul.f32.gmra.mxu0 %v1622
    %v1681 = vpop.f32.mrf.mxu0
    %v1682 = vadd.f32 %v1644, %v1681
    %1683 = vmatmul.f32.gmra.mxu0 %v1623
    %v1684 = vpop.f32.mrf.mxu0
    %v1685 = vadd.f32 %v1644, %v1684
    %1686 = vmatmul.f32.gmra.mxu0 %v1624
    %v1687 = vpop.f32.mrf.mxu0
    %v1688 = vadd.f32 %v1644, %v1687
    %1689 = vmatmul.f32.gmra.mxu0 %v1625
    %v1690 = vpop.f32.mrf.mxu0
    %v1691 = vadd.f32 %v1644, %v1690
    %1692 = vdwg.mxu0
    %v1693 = vmax.f32 %v1664, 0.0
    %v1694 = vmax.f32 %v1667, 0.0
    %v1695 = vmax.f32 %v1670, 0.0
    %v1696 = vmax.f32 %v1673, 0.0
    %v1697 = vmax.f32 %v1676, 0.0
    %v1698 = vmax.f32 %v1679, 0.0
    %v1699 = vmax.f32 %v1682, 0.0
    %v1700 = vmax.f32 %v1685, 0.0
    %v1701 = vmax.f32 %v1688, 0.0
    %v1702 = vmax.f32 %v1691, 0.0
    %v1703 = vld [vmem:[%s63] sm:$0xff]
    %v1704 = vld [vmem:[%s63 + $0x8] sm:$0xff]
    %v1705 = vld [vmem:[%s63 + $0x10] sm:$0xff]
    %v1706 = vld [vmem:[%s63 + $0x18] sm:$0xff]
    %v1707 = vld [vmem:[%s63 + $0x20] sm:$0xff]
    %v1708 = vld [vmem:[%s63 + $0x28] sm:$0xff]
    %v1709 = vld [vmem:[%s63 + $0x30] sm:$0xff]
    %v1710 = vld [vmem:[%s63 + $0x38] sm:$0xff]
    %v1711 = vld [vmem:[%s63 + $0x40] sm:$0xff]
    %v1712 = vld [vmem:[%s63 + $0x48] sm:$0xff]
    %v1713 = vld [vmem:[%s63 + $0x50] sm:$0xff]
    %v1714 = vld [vmem:[%s63 + $0x58] sm:$0xff]
    %v1715 = vld [vmem:[%s63 + $0x60] sm:$0xff]
    %v1716 = vld [vmem:[%s63 + $0x68] sm:$0xff]
    %v1717 = vld [vmem:[%s63 + $0x70] sm:$0xff]
    %v1718 = vld [vmem:[%s63 + $0x78] sm:$0xff]
    %v1719 = vld [vmem:[%s65] sm:$0x1]
    %v1721 = vperm.slane %v1719, 0
    %1723 = vmatpush.msra.mxu0 %v1718
    %1724 = vmatpush.msra.mxu0 %v1717
    %1725 = vmatpush.msra.mxu0 %v1716
    %1726 = vmatpush.msra.mxu0 %v1715
    %1727 = vmatpush.msra.mxu0 %v1714
    %1728 = vmatpush.msra.mxu0 %v1713
    %1729 = vmatpush.msra.mxu0 %v1712
    %1730 = vmatpush.msra.mxu0 %v1711
    %1731 = vmatpush.msra.mxu0 %v1710
    %1732 = vmatpush.msra.mxu0 %v1709
    %1733 = vmatpush.msra.mxu0 %v1708
    %1734 = vmatpush.msra.mxu0 %v1707
    %1735 = vmatpush.msra.mxu0 %v1706
    %1736 = vmatpush.msra.mxu0 %v1705
    %1737 = vmatpush.msra.mxu0 %v1704
    %1738 = vmatpush.msra.mxu0 %v1703
    %1739 = vmatmul.f32.gmra.mxu0 %v1693
    %v1740 = vpop.f32.mrf.mxu0
    %v1741 = vadd.f32 %v1721, %v1740
    %1742 = vmatmul.f32.gmra.mxu0 %v1694
    %v1743 = vpop.f32.mrf.mxu0
    %v1744 = vadd.f32 %v1721, %v1743
    %1745 = vmatmul.f32.gmra.mxu0 %v1695
    %v1746 = vpop.f32.mrf.mxu0
    %v1747 = vadd.f32 %v1721, %v1746
    %1748 = vmatmul.f32.gmra.mxu0 %v1696
    %v1749 = vpop.f32.mrf.mxu0
    %v1750 = vadd.f32 %v1721, %v1749
    %1751 = vmatmul.f32.gmra.mxu0 %v1697
    %v1752 = vpop.f32.mrf.mxu0
    %v1753 = vadd.f32 %v1721, %v1752
    %1754 = vmatmul.f32.gmra.mxu0 %v1698
    %v1755 = vpop.f32.mrf.mxu0
    %v1756 = vadd.f32 %v1721, %v1755
    %1757 = vmatmul.f32.gmra.mxu0 %v1699
    %v1758 = vpop.f32.mrf.mxu0
    %v1759 = vadd.f32 %v1721, %v1758
    %1760 = vmatmul.f32.gmra.mxu0 %v1700
    %v1761 = vpop.f32.mrf.mxu0
    %v1762 = vadd.f32 %v1721, %v1761
    %1763 = vmatmul.f32.gmra.mxu0 %v1701
    %v1764 = vpop.f32.mrf.mxu0
    %v1765 = vadd.f32 %v1721, %v1764
    %1766 = vmatmul.f32.gmra.mxu0 %v1702
    %v1767 = vpop.f32.mrf.mxu0
    %v1768 = vadd.f32 %v1721, %v1767
    %1769 = vdwg.mxu0
    %1770 = vst [vmem:[%s73] sm:$0xff] %v1741
    %1771 = vst [vmem:[%s73 + $0x8] sm:$0xff] %v1744
    %1772 = vst [vmem:[%s73 + $0x10] sm:$0xff] %v1747
    %1773 = vst [vmem:[%s73 + $0x18] sm:$0xff] %v1750
    %1774 = vst [vmem:[%s73 + $0x20] sm:$0xff] %v1753
    %1775 = vst [vmem:[%s73 + $0x28] sm:$0xff] %v1756
    %1776 = vst [vmem:[%s73 + $0x30] sm:$0xff] %v1759
    %1777 = vst [vmem:[%s73 + $0x38] sm:$0xff] %v1762
    %1778 = vst [vmem:[%s73 + $0x40] sm:$0xff] %v1765
    %1779 = vst [vmem:[%s73 + $0x48] sm:$0xff] %v1768
    // Predicated region
    $region134: #{maskgae_forward.3} parent=1 // pred_check
      _
    $region135: #{maskgae_forward.3} parent=1 // pred_check_branch
      %1781 = sbr.rel (0) target = $region137
    $region136: #{maskgae_forward.3} parent=1 // pred_region
      %1783 = vsyncadd [#allocation3], 0
      %s1784 = sshll.u32 [#allocation2], 4
      %s1785 = int_to_ptr.vmem [resolvable:$true] %s1784
      %s1786 = sshll.u32 %s67, 4
      %s1787 = int_to_ptr.hbm [resolvable:$true] %s1786
      %1792 = dma.vmem_to_hbm [thread:$0]  %s1785, 256, %s1787, [#allocation3], 128, 128, 8
    $region137: #{maskgae_forward.3} parent=1 // pred_fallthru
      _
    // Predicated region
    $region138: #{maskgae_forward.3} parent=1 // pred_check
      _
    $region139: #{maskgae_forward.3} parent=1 // pred_check_branch
      %1794 = sbr.rel (0) target = $region141
    $region140: #{maskgae_forward.3} parent=1 // pred_region
      %1796 = vsyncadd [#allocation5], 0
      %s1797 = sshll.u32 [#allocation4], 4
      %s1798 = int_to_ptr.vmem [resolvable:$true] %s1797
      %s1799 = sshll.u32 %s69, 4
      %s1800 = int_to_ptr.hbm [resolvable:$true] %s1799
      %1805 = dma.vmem_to_hbm [thread:$0]  %s1798, 256, %s1800, [#allocation5], 128, 128, 8
    $region141: #{maskgae_forward.3} parent=1 // pred_fallthru
      _
    // Predicated region
    $region142: #{maskgae_forward.3} parent=1 // pred_check
      _
    $region143: #{maskgae_forward.3} parent=1 // pred_check_branch
      %1807 = sbr.rel (0) target = $region145
    $region144: #{maskgae_forward.3} parent=1 // pred_region
      %1809 = vsyncadd [#allocation5], 0
      %s1810 = sshll.u32 [#allocation6], 4
      %s1811 = int_to_ptr.vmem [resolvable:$true] %s1810
      %s1812 = sshll.u32 %s71, 4
      %s1813 = int_to_ptr.hbm [resolvable:$true] %s1812
      %1818 = dma.vmem_to_hbm [thread:$0]  %s1811, 256, %s1813, [#allocation5], 128, 128, 8
    $region145: #{maskgae_forward.3} parent=1 // pred_fallthru
      _
    // Predicated region
    $region146: #{maskgae_forward.3} parent=1 // pred_check
      _
    $region147: #{maskgae_forward.3} parent=1 // pred_check_branch
      %1820 = sbr.rel (0) target = $region149
    $region148: #{maskgae_forward.3} parent=1 // pred_region
      _
    $region149: #{maskgae_forward.3} parent=1 // pred_fallthru
      _
    // Predicated region
    $region150: #{maskgae_forward.3} parent=1 // pred_check
      _
    $region151: #{maskgae_forward.3} parent=1 // pred_check_branch
      %1822 = sbr.rel (0) target = $region153
    $region152: #{maskgae_forward.3} parent=1 // pred_region
      %1824 = dma.done [#allocation3], 256
    $region153: #{maskgae_forward.3} parent=1 // pred_fallthru
      _
    // Predicated region
    $region154: #{maskgae_forward.3} parent=1 // pred_check
      _
    $region155: #{maskgae_forward.3} parent=1 // pred_check_branch
      %1826 = sbr.rel (0) target = $region157
    $region156: #{maskgae_forward.3} parent=1 // pred_region
      %1828 = dma.done [#allocation5], 256
    $region157: #{maskgae_forward.3} parent=1 // pred_fallthru
      _
    // Predicated region
    $region158: #{maskgae_forward.3} parent=1 // pred_check
      _
    $region159: #{maskgae_forward.3} parent=1 // pred_check_branch
      %1830 = sbr.rel (0) target = $region161
    $region160: #{maskgae_forward.3} parent=1 // pred_region
      %1832 = dma.done [#allocation5], 256
    $region161: #{maskgae_forward.3} parent=1 // pred_fallthru
      _
    // Predicated region
    $region162: #{maskgae_forward.3} parent=1 // pred_check
      _
    $region163: #{maskgae_forward.3} parent=1 // pred_check_branch
      %1834 = sbr.rel (0) target = $region165
    $region164: #{maskgae_forward.3} parent=1 // pred_region
      _
    $region165: #{maskgae_forward.3} parent=1 // pred_fallthru
      _
    %1835 = vsyncpa [#allocation3], 1
    %1836 = vsyncpa [#allocation5], 1

</llo_original>
